<compile_context>
chip_gen: v7x
topology: tpu7x:2x2x1
jax: 0.10.0
libtpu: 0.0.40
codegen_flags: <defaults>
</compile_context>

<pallas_src>
import math

import jax
import jax.numpy as jnp
from jax.experimental import pallas as pl
from jax.experimental.pallas import tpu as pltpu

_VSPEC = pl.BlockSpec(memory_space=pltpu.MemorySpace.VMEM)


# --------------------------- in-kernel helpers ----------------------------- #

def _fill(z_ref, pieces):
    """Store `pieces` side by side along the lane axis of a VMEM scratch."""
    off = 0
    for piece in pieces:
        w = piece.shape[1]
        z_ref[:, off:off + w] = piece
        off += w


def _bn_half_relu(p, gamma, beta, eps=1e-5):
    """relu on the second half of the columns (the `_r` branch), then
    training-mode BatchNorm2d over the row axis (biased variance)."""
    h = p.shape[-1] // 2
    col = jax.lax.broadcasted_iota(jnp.int32, p.shape, 1)
    p = jnp.where(col >= h, jnp.maximum(p, 0.0), p)
    mean = jnp.mean(p, axis=0, keepdims=True)
    var = jnp.mean(jnp.square(p - mean), axis=0, keepdims=True)
    return (p - mean) * jax.lax.rsqrt(var + eps) * gamma + beta


# ----------------------------- fused kernels ------------------------------- #

def _make_module_kernel(r_use):
    """One fused kernel for an entire GNNModule forward (x and y update)."""

    def kernel(x_ref, y_ref, dg_ref, dl_ref,
               mgt_ref, mgtt_ref, mlt_ref, mltt_ref,
               pm_ref, pd_ref, pmT_ref, pdT_ref,
               wx_ref, bx_ref, wy_ref, by_ref,
               gx_ref, betax_ref, gy_ref, betay_ref,
               xo_ref, yo_ref, zx_ref, zy_ref):
        f32 = jnp.float32
        x = x_ref[...]
        y = y_ref[...]

        # ---------------- x update (graph nodes) ---------------- #
        pm_y = jnp.dot(pm_ref[...], y, preferred_element_type=f32)
        pd_y = jnp.dot(pd_ref[...], y, preferred_element_type=f32)
        x_list = []
        for mref in [mgt_ref, mgtt_ref][:r_use]:
            x_list.append(jnp.dot(mref[...], x, preferred_element_type=f32))
        _fill(zx_ref, [x, dg_ref[...] * x] + x_list + [pm_y, pd_y])
        # single wide matmul: columns [:h] = main branch, [h:] = `_r` branch
        px = (jnp.dot(zx_ref[...], wx_ref[...], preferred_element_type=f32)
              + bx_ref[...])
        x_new = _bn_half_relu(px, gx_ref[...], betax_ref[...])
        xo_ref[...] = x_new

        # ---------------- y update (line-graph nodes, uses new x) -------- #
        y_list = []
        for mref in [mlt_ref, mltt_ref][:r_use]:
            y_list.append(jnp.dot(mref[...], y, preferred_element_type=f32))
        pm_x = jnp.dot(pmT_ref[...], x_new, preferred_element_type=f32)
        pd_x = jnp.dot(pdT_ref[...], x_new, preferred_element_type=f32)
        _fill(zy_ref, [y, dl_ref[...] * y] + y_list + [pm_x, pd_x])
        py = (jnp.dot(zy_ref[...], wy_ref[...], preferred_element_type=f32)
              + by_ref[...])
        yo_ref[...] = _bn_half_relu(py, gy_ref[...], betay_ref[...])

    return kernel


def _make_final_kernel(r_use):
    """One fused kernel for the entire GNNModule_final forward."""

    def kernel(x_ref, y_ref, dg_ref, mgt_ref, mgtt_ref,
               pm_ref, pd_ref, w_ref, b_ref, o_ref, z_ref):
        f32 = jnp.float32
        x = x_ref[...]
        y = y_ref[...]
        pm_y = jnp.dot(pm_ref[...], y, preferred_element_type=f32)
        pd_y = jnp.dot(pd_ref[...], y, preferred_element_type=f32)
        x_list = []
        for mref in [mgt_ref, mgtt_ref][:r_use]:
            x_list.append(jnp.dot(mref[...], x, preferred_element_type=f32))
        _fill(z_ref, [x, dg_ref[...] * x] + x_list + [pm_y, pd_y])
        o_ref[...] = (jnp.dot(z_ref[...], w_ref[...],
                              preferred_element_type=f32)
                      + b_ref[...])

    return kernel


# --------------------------- weight preparation ----------------------------- #

def _stack_weights(main_lins, r_lins):
    """Stack a list of Linears into one (sum_in, 2h) weight + (1, 2h) bias.

    Column block [:h] implements sum_i Linear_i(z_i) with the main weights,
    column block [h:] the same sum with the `_r` weights.
    """
    w_main = jnp.concatenate([W.T for W, _ in main_lins], axis=0)
    w_r = jnp.concatenate([W.T for W, _ in r_lins], axis=0)
    w = jnp.concatenate([w_main, w_r], axis=1)
    b_main = sum(b for _, b in main_lins)
    b_r = sum(b for _, b in r_lins)
    b = jnp.concatenate([b_main, b_r]).reshape(1, -1)
    return w, b


def _stack_weights_single(lins):
    w = jnp.concatenate([W.T for W, _ in lins], axis=0)
    b = sum(b for _, b in lins).reshape(1, -1)
    return w, b


# ------------------------------- wrappers ----------------------------------- #

def gnn_module_forward(p, x, y, deg_g, deg_lg,
                       mask_g_t, mask_g_tt, mask_lg_t, mask_lg_tt,
                       pm, pd, pmT, pdT, radius):
    r_use = min(radius, 2)          # zip(theta_list, x_list) uses at most 2
    n, cin = x.shape
    m = y.shape[0]

    lin_x = ([p['theta_x'], p['theta_deg']] + p['theta_list'][:r_use]
             + [p['theta_y_0'], p['theta_y_1']])
    lin_x_r = ([p['theta_x_r'], p['theta_deg_r']] + p['theta_list_r'][:r_use]
               + [p['theta_y_0_r'], p['theta_y_1_r']])
    lin_y = ([p['gamma_y'], p['gamma_deg']] + p['gamma_list'][:r_use]
             + [p['gamma_x_0'], p['gamma_x_1']])
    lin_y_r = ([p['gamma_y_r'], p['gamma_deg_r']] + p['gamma_list_r'][:r_use]
               + [p['gamma_x_0_r'], p['gamma_x_1_r']])

    wx, bx = _stack_weights(lin_x, lin_x_r)     # ((4+r)*cin, out)
    wy, by = _stack_weights(lin_y, lin_y_r)     # ((2+r)*cin + 2*out, out)
    out_feats = wx.shape[1]
    kx, ky = wx.shape[0], wy.shape[0]

    gx = p['bn_x'][0].reshape(1, -1)
    betax = p['bn_x'][1].reshape(1, -1)
    gy = p['bn_y'][0].reshape(1, -1)
    betay = p['bn_y'][1].reshape(1, -1)

    flops = 2 * (2 * n * m * cin + 2 * n * n * cin        # pm_y/pd_y, x_t/x_tt
                 + 2 * m * m * cin + 2 * m * n * out_feats  # y_t/y_tt, pm_x/pd_x
                 + n * kx * out_feats + m * ky * out_feats  # projections
                 ) + 10 * (n + m) * out_feats               # BN / relu
    bytes_accessed = 4 * (x.size + y.size + deg_g.size + deg_lg.size
                          + mask_g_t.size + mask_g_tt.size
                          + mask_lg_t.size + mask_lg_tt.size
                          + 2 * pm.size + 2 * pd.size
                          + wx.size + wy.size + bx.size + by.size
                          + 4 * out_feats
                          + n * out_feats + m * out_feats)

    x_new, y_new = pl.pallas_call(
        _make_module_kernel(r_use),
        out_shape=(jax.ShapeDtypeStruct((n, out_feats), jnp.float32),
                   jax.ShapeDtypeStruct((m, out_feats), jnp.float32)),
        in_specs=[_VSPEC] * 20,
        out_specs=(_VSPEC, _VSPEC),
        scratch_shapes=[pltpu.VMEM((n, kx), jnp.float32),
                        pltpu.VMEM((m, ky), jnp.float32)],
        cost_estimate=pl.CostEstimate(flops=int(flops),
                                      transcendentals=int(2 * out_feats),
                                      bytes_accessed=int(bytes_accessed)),
    )(x, y, deg_g, deg_lg, mask_g_t, mask_g_tt, mask_lg_t, mask_lg_tt,
      pm, pd, pmT, pdT, wx, bx, wy, by, gx, betax, gy, betay)
    return x_new, y_new


def gnn_final_forward(p, x, y, deg_g, mask_g_t, mask_g_tt, pm, pd, radius):
    r_use = min(radius, 2)
    n, cin = x.shape
    m = y.shape[0]
    lin = ([p['theta_x'], p['theta_deg']] + p['theta_list'][:r_use]
           + [p['theta_y_0'], p['theta_y_1']])
    w, b = _stack_weights_single(lin)
    out_feats = w.shape[1]
    kz = w.shape[0]

    flops = 2 * (2 * n * m * cin + 2 * n * n * cin + n * kz * out_feats)
    bytes_accessed = 4 * (x.size + y.size + deg_g.size
                          + mask_g_t.size + mask_g_tt.size
                          + pm.size + pd.size + w.size + b.size
                          + n * out_feats)

    return pl.pallas_call(
        _make_final_kernel(r_use),
        out_shape=jax.ShapeDtypeStruct((n, out_feats), jnp.float32),
        in_specs=[_VSPEC] * 9,
        out_specs=_VSPEC,
        scratch_shapes=[pltpu.VMEM((n, kz), jnp.float32)],
        cost_estimate=pl.CostEstimate(flops=int(flops),
                                      transcendentals=0,
                                      bytes_accessed=int(bytes_accessed)),
    )(x, y, deg_g, mask_g_t, mask_g_tt, pm, pd, w, b)


def gnn_forward(params, deg_g, deg_lg,
                mask_g_t, mask_g_tt, mask_lg_t, mask_lg_tt, pm, pd, *, radius):
    f32 = jnp.float32
    deg_g = deg_g.astype(f32)
    deg_lg = deg_lg.astype(f32)
    mask_g_t = mask_g_t.astype(f32)
    mask_g_tt = mask_g_tt.astype(f32)
    mask_lg_t = mask_lg_t.astype(f32)
    mask_lg_tt = mask_lg_tt.astype(f32)
    pm = pm.astype(f32)
    pd = pd.astype(f32)
    # transposed incidence matrices computed once, outside the module loop
    pmT = pm.T
    pdT = pd.T

    x, y = deg_g, deg_lg
    for p in params['modules']:
        x, y = gnn_module_forward(p, x, y, deg_g, deg_lg,
                                  mask_g_t, mask_g_tt, mask_lg_t, mask_lg_tt,
                                  pm, pd, pmT, pdT, radius)
    x = gnn_final_forward(params['final'], x, y, deg_g,
                          mask_g_t, mask_g_tt, pm, pd, radius)
    return x


# --------------------------- parameter construction ------------------------- #

def init_linear(key, in_f, out_f):
    kw, kb = jax.random.split(key)
    bound = 1.0 / math.sqrt(in_f)
    W = jax.random.uniform(kw, (out_f, in_f), jnp.float32, -bound, bound)
    b = jax.random.uniform(kb, (out_f,), jnp.float32, -bound, bound)
    return W, b


def init_gnn_module(key, in_feats, out_feats, radius):
    h = out_feats // 2
    p = {}

    def nxt():
        nonlocal key
        key, sub = jax.random.split(key)
        return sub

    for name in ['theta_x', 'theta_deg', 'theta_y_0', 'theta_y_1',
                 'theta_x_r', 'theta_deg_r', 'theta_y_0_r', 'theta_y_1_r',
                 'gamma_y', 'gamma_deg', 'gamma_y_r', 'gamma_deg_r']:
        p[name] = init_linear(nxt(), in_feats, h)
    p['theta_list'] = [init_linear(nxt(), in_feats, h) for _ in range(radius)]
    p['theta_list_r'] = [init_linear(nxt(), in_feats, h) for _ in range(radius)]
    p['gamma_list'] = [init_linear(nxt(), in_feats, h) for _ in range(radius)]
    p['gamma_list_r'] = [init_linear(nxt(), in_feats, h) for _ in range(radius)]
    for name in ['gamma_x_0', 'gamma_x_1', 'gamma_x_0_r', 'gamma_x_1_r']:
        p[name] = init_linear(nxt(), out_feats, h)
    # BatchNorm2d defaults: weight=1, bias=0
    p['bn_x'] = (jnp.ones((out_feats,), jnp.float32),
                 jnp.zeros((out_feats,), jnp.float32))
    p['bn_y'] = (jnp.ones((out_feats,), jnp.float32),
                 jnp.zeros((out_feats,), jnp.float32))
    return p


def init_gnn_final(key, in_feats, out_feats, radius):
    p = {}

    def nxt():
        nonlocal key
        key, sub = jax.random.split(key)
        return sub

    for name in ['theta_x', 'theta_deg', 'theta_y_0', 'theta_y_1']:
        p[name] = init_linear(nxt(), in_feats, out_feats)
    p['theta_list'] = [init_linear(nxt(), in_feats, out_feats)
                       for _ in range(radius)]
    return p


# ---------------------------------- driver ---------------------------------- #

if __name__ == "__main__":
    key = jax.random.PRNGKey(0)
    feats = [1, 16, 8]        # -> one GNNModule(1, 16) + GNNModule_final(16, 8)
    radius = 2
    N = 16                    # graph nodes
    M = 24                    # line-graph nodes (edges)

    keys = jax.random.split(key, 10)
    deg_g = jax.random.randint(keys[0], (N, 1), 1, 5).astype(jnp.float32)
    deg_lg = jax.random.randint(keys[1], (M, 1), 1, 5).astype(jnp.float32)
    pm = (jax.random.uniform(keys[2], (N, M)) < 0.2).astype(jnp.float32)
    pd = (jax.random.uniform(keys[3], (N, M)) < 0.2).astype(jnp.float32)
    mask_g_t = (jax.random.uniform(keys[4], (N, N)) < 0.3).astype(jnp.float32)
    mask_g_tt = (jax.random.uniform(keys[5], (N, N)) < 0.3).astype(jnp.float32)
    mask_lg_t = (jax.random.uniform(keys[6], (M, M)) < 0.3).astype(jnp.float32)
    mask_lg_tt = (jax.random.uniform(keys[7], (M, M)) < 0.3).astype(jnp.float32)

    pkey = keys[8]
    modules = []
    for m_in, n_out in zip(feats[:-2], feats[1:-1]):
        pkey, sub = jax.random.split(pkey)
        modules.append(init_gnn_module(sub, m_in, n_out, radius))
    pkey, sub = jax.random.split(pkey)
    final = init_gnn_final(sub, feats[-2], feats[-1], radius)
    params = {'modules': modules, 'final': final}

    forward = jax.jit(gnn_forward, static_argnames=('radius',))
    out = forward(params, deg_g, deg_lg,
                  mask_g_t, mask_g_tt, mask_lg_t, mask_lg_tt,
                  pm, pd, radius=radius)
    out = jax.block_until_ready(out)
    assert out.shape == (N, feats[-1]) and out.dtype == jnp.float32
    assert bool(jnp.all(jnp.isfinite(out)))
    print("KERNEL_OK")
</pallas_src>

<mosaic_0001>
module attributes {stable_mosaic.version = 11 : i64} {
  func.func @kernel(%arg0: memref<16x16xf32, #tpu.memory_space<vmem>>, %arg1: memref<24x16xf32, #tpu.memory_space<vmem>>, %arg2: memref<16x1xf32, #tpu.memory_space<vmem>>, %arg3: memref<16x16xf32, #tpu.memory_space<vmem>>, %arg4: memref<16x16xf32, #tpu.memory_space<vmem>>, %arg5: memref<16x24xf32, #tpu.memory_space<vmem>>, %arg6: memref<16x24xf32, #tpu.memory_space<vmem>>, %arg7: memref<96x8xf32, #tpu.memory_space<vmem>>, %arg8: memref<1x8xf32, #tpu.memory_space<vmem>>, %arg9: memref<16x8xf32, #tpu.memory_space<vmem>>, %arg10: memref<16x96xf32, #tpu.memory_space<vmem>>) attributes {dimension_semantics = [], scalar_prefetch = 0 : i64, scratch_operands = 1 : i64, tpu.core_type = #tpu.core_type<tc>} {
    %c0 = arith.constant 0 : index
    %c0_0 = arith.constant 0 : index
    %0 = vector.load %arg0[%c0, %c0_0] : memref<16x16xf32, #tpu.memory_space<vmem>>, vector<16x16xf32>
    %c0_1 = arith.constant 0 : index
    %c0_2 = arith.constant 0 : index
    %1 = vector.load %arg1[%c0_1, %c0_2] : memref<24x16xf32, #tpu.memory_space<vmem>>, vector<24x16xf32>
    %c0_3 = arith.constant 0 : index
    %c0_4 = arith.constant 0 : index
    %2 = vector.load %arg5[%c0_3, %c0_4] : memref<16x24xf32, #tpu.memory_space<vmem>>, vector<16x24xf32>
    %cst = arith.constant dense<0.000000e+00> : vector<16x16xf32>
    %3 = tpu.matmul %2, %1, %cst {dimension_numbers = #tpu.dot_dimension_numbers<[1], [0], [0], [1], [0, 0, 1, 1], [], []>} : vector<16x24xf32>, vector<24x16xf32>, vector<16x16xf32> -> vector<16x16xf32>
    %c0_5 = arith.constant 0 : index
    %c0_6 = arith.constant 0 : index
    %4 = vector.load %arg6[%c0_5, %c0_6] : memref<16x24xf32, #tpu.memory_space<vmem>>, vector<16x24xf32>
    %cst_7 = arith.constant dense<0.000000e+00> : vector<16x16xf32>
    %5 = tpu.matmul %4, %1, %cst_7 {dimension_numbers = #tpu.dot_dimension_numbers<[1], [0], [0], [1], [0, 0, 1, 1], [], []>} : vector<16x24xf32>, vector<24x16xf32>, vector<16x16xf32> -> vector<16x16xf32>
    %c0_8 = arith.constant 0 : index
    %c0_9 = arith.constant 0 : index
    %6 = vector.load %arg3[%c0_8, %c0_9] : memref<16x16xf32, #tpu.memory_space<vmem>>, vector<16x16xf32>
    %cst_10 = arith.constant dense<0.000000e+00> : vector<16x16xf32>
    %7 = tpu.matmul %6, %0, %cst_10 {dimension_numbers = #tpu.dot_dimension_numbers<[1], [0], [0], [1], [0, 0, 1, 1], [], []>} : vector<16x16xf32>, vector<16x16xf32>, vector<16x16xf32> -> vector<16x16xf32>
    %c0_11 = arith.constant 0 : index
    %c0_12 = arith.constant 0 : index
    %8 = vector.load %arg4[%c0_11, %c0_12] : memref<16x16xf32, #tpu.memory_space<vmem>>, vector<16x16xf32>
    %cst_13 = arith.constant dense<0.000000e+00> : vector<16x16xf32>
    %9 = tpu.matmul %8, %0, %cst_13 {dimension_numbers = #tpu.dot_dimension_numbers<[1], [0], [0], [1], [0, 0, 1, 1], [], []>} : vector<16x16xf32>, vector<16x16xf32>, vector<16x16xf32> -> vector<16x16xf32>
    %c0_14 = arith.constant 0 : index
    %c0_15 = arith.constant 0 : index
    %10 = vector.load %arg2[%c0_14, %c0_15] : memref<16x1xf32, #tpu.memory_space<vmem>>, vector<16x1xf32>
    %11 = vector.broadcast %10 : vector<16x1xf32> to vector<16x16xf32>
    %12 = arith.mulf %11, %0 : vector<16x16xf32>
    %c0_16 = arith.constant 0 : index
    %c0_17 = arith.constant 0 : index
    %13 = vector.load %arg10[%c0_16, %c0_17] : memref<16x96xf32, #tpu.memory_space<vmem>>, vector<16x16xf32>
    tpu.vector_store %arg10[%c0_16, %c0_17], %0 {strides = array<i32>} : memref<16x96xf32, #tpu.memory_space<vmem>>, vector<16x16xf32>,
    %c0_18 = arith.constant 0 : index
    %c16 = arith.constant 16 : index
    %14 = vector.load %arg10[%c0_18, %c16] : memref<16x96xf32, #tpu.memory_space<vmem>>, vector<16x16xf32>
    tpu.vector_store %arg10[%c0_18, %c16], %12 {strides = array<i32>} : memref<16x96xf32, #tpu.memory_space<vmem>>, vector<16x16xf32>,
    %c0_19 = arith.constant 0 : index
    %c32 = arith.constant 32 : index
    %15 = vector.load %arg10[%c0_19, %c32] : memref<16x96xf32, #tpu.memory_space<vmem>>, vector<16x16xf32>
    tpu.vector_store %arg10[%c0_19, %c32], %7 {strides = array<i32>} : memref<16x96xf32, #tpu.memory_space<vmem>>, vector<16x16xf32>,
    %c0_20 = arith.constant 0 : index
    %c48 = arith.constant 48 : index
    %16 = vector.load %arg10[%c0_20, %c48] : memref<16x96xf32, #tpu.memory_space<vmem>>, vector<16x16xf32>
    tpu.vector_store %arg10[%c0_20, %c48], %9 {strides = array<i32>} : memref<16x96xf32, #tpu.memory_space<vmem>>, vector<16x16xf32>,
    %c0_21 = arith.constant 0 : index
    %c64 = arith.constant 64 : index
    %17 = vector.load %arg10[%c0_21, %c64] : memref<16x96xf32, #tpu.memory_space<vmem>>, vector<16x16xf32>
    tpu.vector_store %arg10[%c0_21, %c64], %3 {strides = array<i32>} : memref<16x96xf32, #tpu.memory_space<vmem>>, vector<16x16xf32>,
    %c0_22 = arith.constant 0 : index
    %c80 = arith.constant 80 : index
    %18 = vector.load %arg10[%c0_22, %c80] : memref<16x96xf32, #tpu.memory_space<vmem>>, vector<16x16xf32>
    tpu.vector_store %arg10[%c0_22, %c80], %5 {strides = array<i32>} : memref<16x96xf32, #tpu.memory_space<vmem>>, vector<16x16xf32>,
    %c0_23 = arith.constant 0 : index
    %c0_24 = arith.constant 0 : index
    %19 = vector.load %arg10[%c0_23, %c0_24] : memref<16x96xf32, #tpu.memory_space<vmem>>, vector<16x96xf32>
    %c0_25 = arith.constant 0 : index
    %c0_26 = arith.constant 0 : index
    %20 = vector.load %arg7[%c0_25, %c0_26] : memref<96x8xf32, #tpu.memory_space<vmem>>, vector<96x8xf32>
    %cst_27 = arith.constant dense<0.000000e+00> : vector<16x8xf32>
    %21 = tpu.matmul %19, %20, %cst_27 {dimension_numbers = #tpu.dot_dimension_numbers<[1], [0], [0], [1], [0, 0, 1, 1], [], []>} : vector<16x96xf32>, vector<96x8xf32>, vector<16x8xf32> -> vector<16x8xf32>
    %c0_28 = arith.constant 0 : index
    %c0_29 = arith.constant 0 : index
    %22 = vector.load %arg8[%c0_28, %c0_29] : memref<1x8xf32, #tpu.memory_space<vmem>>, vector<1x8xf32>
    %23 = vector.broadcast %22 : vector<1x8xf32> to vector<16x8xf32>
    %24 = arith.addf %21, %23 : vector<16x8xf32>
    %c0_30 = arith.constant 0 : index
    %c0_31 = arith.constant 0 : index
    %25 = vector.load %arg9[%c0_30, %c0_31] : memref<16x8xf32, #tpu.memory_space<vmem>>, vector<16x8xf32>
    tpu.vector_store %arg9[%c0_30, %c0_31], %24 {strides = array<i32>} : memref<16x8xf32, #tpu.memory_space<vmem>>, vector<16x8xf32>,
    return
  }
}

module attributes {stable_mosaic.version = 11 : i64} {
  func.func @kernel(%arg0: memref<16x1xf32, #tpu.memory_space<vmem>>, %arg1: memref<24x1xf32, #tpu.memory_space<vmem>>, %arg2: memref<16x1xf32, #tpu.memory_space<vmem>>, %arg3: memref<24x1xf32, #tpu.memory_space<vmem>>, %arg4: memref<16x16xf32, #tpu.memory_space<vmem>>, %arg5: memref<16x16xf32, #tpu.memory_space<vmem>>, %arg6: memref<24x24xf32, #tpu.memory_space<vmem>>, %arg7: memref<24x24xf32, #tpu.memory_space<vmem>>, %arg8: memref<16x24xf32, #tpu.memory_space<vmem>>, %arg9: memref<16x24xf32, #tpu.memory_space<vmem>>, %arg10: memref<24x16xf32, #tpu.memory_space<vmem>>, %arg11: memref<24x16xf32, #tpu.memory_space<vmem>>, %arg12: memref<6x16xf32, #tpu.memory_space<vmem>>, %arg13: memref<1x16xf32, #tpu.memory_space<vmem>>, %arg14: memref<36x16xf32, #tpu.memory_space<vmem>>, %arg15: memref<1x16xf32, #tpu.memory_space<vmem>>, %arg16: memref<1x16xf32, #tpu.memory_space<vmem>>, %arg17: memref<1x16xf32, #tpu.memory_space<vmem>>, %arg18: memref<1x16xf32, #tpu.memory_space<vmem>>, %arg19: memref<1x16xf32, #tpu.memory_space<vmem>>, %arg20: memref<16x16xf32, #tpu.memory_space<vmem>>, %arg21: memref<24x16xf32, #tpu.memory_space<vmem>>, %arg22: memref<16x6xf32, #tpu.memory_space<vmem>>, %arg23: memref<24x36xf32, #tpu.memory_space<vmem>>) attributes {dimension_semantics = [], scalar_prefetch = 0 : i64, scratch_operands = 2 : i64, tpu.core_type = #tpu.core_type<tc>} {
    %c0 = arith.constant 0 : index
    %c0_0 = arith.constant 0 : index
    %0 = vector.load %arg0[%c0, %c0_0] : memref<16x1xf32, #tpu.memory_space<vmem>>, vector<16x1xf32>
    %c0_1 = arith.constant 0 : index
    %c0_2 = arith.constant 0 : index
    %1 = vector.load %arg1[%c0_1, %c0_2] : memref<24x1xf32, #tpu.memory_space<vmem>>, vector<24x1xf32>
    %c0_3 = arith.constant 0 : index
    %c0_4 = arith.constant 0 : index
    %2 = vector.load %arg8[%c0_3, %c0_4] : memref<16x24xf32, #tpu.memory_space<vmem>>, vector<16x24xf32>
    %cst = arith.constant dense<0.000000e+00> : vector<16x1xf32>
    %3 = tpu.matmul %2, %1, %cst {dimension_numbers = #tpu.dot_dimension_numbers<[1], [0], [0], [1], [0, 0, 1, 1], [], []>} : vector<16x24xf32>, vector<24x1xf32>, vector<16x1xf32> -> vector<16x1xf32>
    %c0_5 = arith.constant 0 : index
    %c0_6 = arith.constant 0 : index
    %4 = vector.load %arg9[%c0_5, %c0_6] : memref<16x24xf32, #tpu.memory_space<vmem>>, vector<16x24xf32>
    %cst_7 = arith.constant dense<0.000000e+00> : vector<16x1xf32>
    %5 = tpu.matmul %4, %1, %cst_7 {dimension_numbers = #tpu.dot_dimension_numbers<[1], [0], [0], [1], [0, 0, 1, 1], [], []>} : vector<16x24xf32>, vector<24x1xf32>, vector<16x1xf32> -> vector<16x1xf32>
    %c0_8 = arith.constant 0 : index
    %c0_9 = arith.constant 0 : index
    %6 = vector.load %arg4[%c0_8, %c0_9] : memref<16x16xf32, #tpu.memory_space<vmem>>, vector<16x16xf32>
    %cst_10 = arith.constant dense<0.000000e+00> : vector<16x1xf32>
    %7 = tpu.matmul %6, %0, %cst_10 {dimension_numbers = #tpu.dot_dimension_numbers<[1], [0], [0], [1], [0, 0, 1, 1], [], []>} : vector<16x16xf32>, vector<16x1xf32>, vector<16x1xf32> -> vector<16x1xf32>
    %c0_11 = arith.constant 0 : index
    %c0_12 = arith.constant 0 : index
    %8 = vector.load %arg5[%c0_11, %c0_12] : memref<16x16xf32, #tpu.memory_space<vmem>>, vector<16x16xf32>
    %cst_13 = arith.constant dense<0.000000e+00> : vector<16x1xf32>
    %9 = tpu.matmul %8, %0, %cst_13 {dimension_numbers = #tpu.dot_dimension_numbers<[1], [0], [0], [1], [0, 0, 1, 1], [], []>} : vector<16x16xf32>, vector<16x1xf32>, vector<16x1xf32> -> vector<16x1xf32>
    %c0_14 = arith.constant 0 : index
    %c0_15 = arith.constant 0 : index
    %10 = vector.load %arg2[%c0_14, %c0_15] : memref<16x1xf32, #tpu.memory_space<vmem>>, vector<16x1xf32>
    %11 = arith.mulf %10, %0 : vector<16x1xf32>
    %c0_16 = arith.constant 0 : index
    %c0_17 = arith.constant 0 : index
    %12 = vector.load %arg22[%c0_16, %c0_17] : memref<16x6xf32, #tpu.memory_space<vmem>>, vector<16x1xf32>
    tpu.vector_store %arg22[%c0_16, %c0_17], %0 {strides = array<i32>} : memref<16x6xf32, #tpu.memory_space<vmem>>, vector<16x1xf32>,
    %c0_18 = arith.constant 0 : index
    %c1 = arith.constant 1 : index
    %13 = vector.load %arg22[%c0_18, %c1] : memref<16x6xf32, #tpu.memory_space<vmem>>, vector<16x1xf32>
    tpu.vector_store %arg22[%c0_18, %c1], %11 {strides = array<i32>} : memref<16x6xf32, #tpu.memory_space<vmem>>, vector<16x1xf32>,
    %c0_19 = arith.constant 0 : index
    %c2 = arith.constant 2 : index
    %14 = vector.load %arg22[%c0_19, %c2] : memref<16x6xf32, #tpu.memory_space<vmem>>, vector<16x1xf32>
    tpu.vector_store %arg22[%c0_19, %c2], %7 {strides = array<i32>} : memref<16x6xf32, #tpu.memory_space<vmem>>, vector<16x1xf32>,
    %c0_20 = arith.constant 0 : index
    %c3 = arith.constant 3 : index
    %15 = vector.load %arg22[%c0_20, %c3] : memref<16x6xf32, #tpu.memory_space<vmem>>, vector<16x1xf32>
    tpu.vector_store %arg22[%c0_20, %c3], %9 {strides = array<i32>} : memref<16x6xf32, #tpu.memory_space<vmem>>, vector<16x1xf32>,
    %c0_21 = arith.constant 0 : index
    %c4 = arith.constant 4 : index
    %16 = vector.load %arg22[%c0_21, %c4] : memref<16x6xf32, #tpu.memory_space<vmem>>, vector<16x1xf32>
    tpu.vector_store %arg22[%c0_21, %c4], %3 {strides = array<i32>} : memref<16x6xf32, #tpu.memory_space<vmem>>, vector<16x1xf32>,
    %c0_22 = arith.constant 0 : index
    %c5 = arith.constant 5 : index
    %17 = vector.load %arg22[%c0_22, %c5] : memref<16x6xf32, #tpu.memory_space<vmem>>, vector<16x1xf32>
    tpu.vector_store %arg22[%c0_22, %c5], %5 {strides = array<i32>} : memref<16x6xf32, #tpu.memory_space<vmem>>, vector<16x1xf32>,
    %c0_23 = arith.constant 0 : index
    %c0_24 = arith.constant 0 : index
    %18 = vector.load %arg22[%c0_23, %c0_24] : memref<16x6xf32, #tpu.memory_space<vmem>>, vector<16x6xf32>
    %c0_25 = arith.constant 0 : index
    %c0_26 = arith.constant 0 : index
    %19 = vector.load %arg12[%c0_25, %c0_26] : memref<6x16xf32, #tpu.memory_space<vmem>>, vector<6x16xf32>
    %cst_27 = arith.constant dense<0.000000e+00> : vector<16x16xf32>
    %20 = tpu.matmul %18, %19, %cst_27 {dimension_numbers = #tpu.dot_dimension_numbers<[1], [0], [0], [1], [0, 0, 1, 1], [], []>} : vector<16x6xf32>, vector<6x16xf32>, vector<16x16xf32> -> vector<16x16xf32>
    %c0_28 = arith.constant 0 : index
    %c0_29 = arith.constant 0 : index
    %21 = vector.load %arg13[%c0_28, %c0_29] : memref<1x16xf32, #tpu.memory_space<vmem>>, vector<1x16xf32>
    %22 = vector.broadcast %21 : vector<1x16xf32> to vector<16x16xf32>
    %23 = arith.addf %20, %22 : vector<16x16xf32>
    %c0_30 = arith.constant 0 : index
    %c0_31 = arith.constant 0 : index
    %24 = vector.load %arg16[%c0_30, %c0_31] : memref<1x16xf32, #tpu.memory_space<vmem>>, vector<1x16xf32>
    %c0_32 = arith.constant 0 : index
    %c0_33 = arith.constant 0 : index
    %25 = vector.load %arg17[%c0_32, %c0_33] : memref<1x16xf32, #tpu.memory_space<vmem>>, vector<1x16xf32>
    %26 = tpu.iota {dimensions = array<i32: 1>} : vector<16x16xi32>
    %c8_i32 = arith.constant 8 : i32
    %27 = vector.broadcast %c8_i32 : i32 to vector<16x16xi32>
    %28 = arith.cmpi sge, %26, %27 : vector<16x16xi32>
    %cst_34 = arith.constant 0.000000e+00 : f32
    %29 = vector.broadcast %cst_34 : f32 to vector<16x16xf32>
    %30 = arith.maximumf %23, %29 : vector<16x16xf32>
    %31 = arith.select %28, %30, %23 : vector<16x16xi1>, vector<16x16xf32>
    %cst_35 = arith.constant dense<0.000000e+00> : vector<16xf32>
    %32 = vector.multi_reduction <add>, %31, %cst_35 [0] : vector<16x16xf32> to vector<16xf32>
    %33 = vector.shape_cast %32 : vector<16xf32> to vector<1x16xf32>
    %cst_36 = arith.constant 1.600000e+01 : f32
    %34 = vector.broadcast %cst_36 : f32 to vector<1x16xf32>
    %35 = arith.divf %33, %34 : vector<1x16xf32>
    %36 = vector.broadcast %35 : vector<1x16xf32> to vector<16x16xf32>
    %37 = arith.subf %31, %36 : vector<16x16xf32>
    %38 = arith.mulf %37, %37 : vector<16x16xf32>
    %cst_37 = arith.constant dense<0.000000e+00> : vector<16xf32>
    %39 = vector.multi_reduction <add>, %38, %cst_37 [0] : vector<16x16xf32> to vector<16xf32>
    %40 = vector.shape_cast %39 : vector<16xf32> to vector<1x16xf32>
    %cst_38 = arith.constant 1.600000e+01 : f32
    %41 = vector.broadcast %cst_38 : f32 to vector<1x16xf32>
    %42 = arith.divf %40, %41 : vector<1x16xf32>
    %43 = vector.broadcast %35 : vector<1x16xf32> to vector<16x16xf32>
    %44 = arith.subf %31, %43 : vector<16x16xf32>
    %cst_39 = arith.constant 9.99999974E-6 : f32
    %45 = vector.broadcast %cst_39 : f32 to vector<1x16xf32>
    %46 = arith.addf %42, %45 : vector<1x16xf32>
    %47 = math.rsqrt %46 : vector<1x16xf32>
    %48 = vector.broadcast %47 : vector<1x16xf32> to vector<16x16xf32>
    %49 = arith.mulf %44, %48 : vector<16x16xf32>
    %50 = vector.broadcast %24 : vector<1x16xf32> to vector<16x16xf32>
    %51 = arith.mulf %49, %50 : vector<16x16xf32>
    %52 = vector.broadcast %25 : vector<1x16xf32> to vector<16x16xf32>
    %53 = arith.addf %51, %52 : vector<16x16xf32>
    %c0_40 = arith.constant 0 : index
    %c0_41 = arith.constant 0 : index
    %54 = vector.load %arg20[%c0_40, %c0_41] : memref<16x16xf32, #tpu.memory_space<vmem>>, vector<16x16xf32>
    tpu.vector_store %arg20[%c0_40, %c0_41], %53 {strides = array<i32>} : memref<16x16xf32, #tpu.memory_space<vmem>>, vector<16x16xf32>,
    %c0_42 = arith.constant 0 : index
    %c0_43 = arith.constant 0 : index
    %55 = vector.load %arg6[%c0_42, %c0_43] : memref<24x24xf32, #tpu.memory_space<vmem>>, vector<24x24xf32>
    %cst_44 = arith.constant dense<0.000000e+00> : vector<24x1xf32>
    %56 = tpu.matmul %55, %1, %cst_44 {dimension_numbers = #tpu.dot_dimension_numbers<[1], [0], [0], [1], [0, 0, 1, 1], [], []>} : vector<24x24xf32>, vector<24x1xf32>, vector<24x1xf32> -> vector<24x1xf32>
    %c0_45 = arith.constant 0 : index
    %c0_46 = arith.constant 0 : index
    %57 = vector.load %arg7[%c0_45, %c0_46] : memref<24x24xf32, #tpu.memory_space<vmem>>, vector<24x24xf32>
    %cst_47 = arith.constant dense<0.000000e+00> : vector<24x1xf32>
    %58 = tpu.matmul %57, %1, %cst_47 {dimension_numbers = #tpu.dot_dimension_numbers<[1], [0], [0], [1], [0, 0, 1, 1], [], []>} : vector<24x24xf32>, vector<24x1xf32>, vector<24x1xf32> -> vector<24x1xf32>
    %c0_48 = arith.constant 0 : index
    %c0_49 = arith.constant 0 : index
    %59 = vector.load %arg10[%c0_48, %c0_49] : memref<24x16xf32, #tpu.memory_space<vmem>>, vector<24x16xf32>
    %cst_50 = arith.constant dense<0.000000e+00> : vector<24x16xf32>
    %60 = tpu.matmul %59, %53, %cst_50 {dimension_numbers = #tpu.dot_dimension_numbers<[1], [0], [0], [1], [0, 0, 1, 1], [], []>} : vector<24x16xf32>, vector<16x16xf32>, vector<24x16xf32> -> vector<24x16xf32>
    %c0_51 = arith.constant 0 : index
    %c0_52 = arith.constant 0 : index
    %61 = vector.load %arg11[%c0_51, %c0_52] : memref<24x16xf32, #tpu.memory_space<vmem>>, vector<24x16xf32>
    %cst_53 = arith.constant dense<0.000000e+00> : vector<24x16xf32>
    %62 = tpu.matmul %61, %53, %cst_53 {dimension_numbers = #tpu.dot_dimension_numbers<[1], [0], [0], [1], [0, 0, 1, 1], [], []>} : vector<24x16xf32>, vector<16x16xf32>, vector<24x16xf32> -> vector<24x16xf32>
    %c0_54 = arith.constant 0 : index
    %c0_55 = arith.constant 0 : index
    %63 = vector.load %arg3[%c0_54, %c0_55] : memref<24x1xf32, #tpu.memory_space<vmem>>, vector<24x1xf32>
    %64 = arith.mulf %63, %1 : vector<24x1xf32>
    %c0_56 = arith.constant 0 : index
    %c0_57 = arith.constant 0 : index
    %65 = vector.load %arg23[%c0_56, %c0_57] : memref<24x36xf32, #tpu.memory_space<vmem>>, vector<24x1xf32>
    tpu.vector_store %arg23[%c0_56, %c0_57], %1 {strides = array<i32>} : memref<24x36xf32, #tpu.memory_space<vmem>>, vector<24x1xf32>,
    %c0_58 = arith.constant 0 : index
    %c1_59 = arith.constant 1 : index
    %66 = vector.load %arg23[%c0_58, %c1_59] : memref<24x36xf32, #tpu.memory_space<vmem>>, vector<24x1xf32>
    tpu.vector_store %arg23[%c0_58, %c1_59], %64 {strides = array<i32>} : memref<24x36xf32, #tpu.memory_space<vmem>>, vector<24x1xf32>,
    %c0_60 = arith.constant 0 : index
    %c2_61 = arith.constant 2 : index
    %67 = vector.load %arg23[%c0_60, %c2_61] : memref<24x36xf32, #tpu.memory_space<vmem>>, vector<24x1xf32>
    tpu.vector_store %arg23[%c0_60, %c2_61], %56 {strides = array<i32>} : memref<24x36xf32, #tpu.memory_space<vmem>>, vector<24x1xf32>,
    %c0_62 = arith.constant 0 : index
    %c3_63 = arith.constant 3 : index
    %68 = vector.load %arg23[%c0_62, %c3_63] : memref<24x36xf32, #tpu.memory_space<vmem>>, vector<24x1xf32>
    tpu.vector_store %arg23[%c0_62, %c3_63], %58 {strides = array<i32>} : memref<24x36xf32, #tpu.memory_space<vmem>>, vector<24x1xf32>,
    %c0_64 = arith.constant 0 : index
    %c4_65 = arith.constant 4 : index
    %69 = vector.load %arg23[%c0_64, %c4_65] : memref<24x36xf32, #tpu.memory_space<vmem>>, vector<24x16xf32>
    tpu.vector_store %arg23[%c0_64, %c4_65], %60 {strides = array<i32>} : memref<24x36xf32, #tpu.memory_space<vmem>>, vector<24x16xf32>,
    %c0_66 = arith.constant 0 : index
    %c20 = arith.constant 20 : index
    %70 = vector.load %arg23[%c0_66, %c20] : memref<24x36xf32, #tpu.memory_space<vmem>>, vector<24x16xf32>
    tpu.vector_store %arg23[%c0_66, %c20], %62 {strides = array<i32>} : memref<24x36xf32, #tpu.memory_space<vmem>>, vector<24x16xf32>,
    %c0_67 = arith.constant 0 : index
    %c0_68 = arith.constant 0 : index
    %71 = vector.load %arg23[%c0_67, %c0_68] : memref<24x36xf32, #tpu.memory_space<vmem>>, vector<24x36xf32>
    %c0_69 = arith.constant 0 : index
    %c0_70 = arith.constant 0 : index
    %72 = vector.load %arg14[%c0_69, %c0_70] : memref<36x16xf32, #tpu.memory_space<vmem>>, vector<36x16xf32>
    %cst_71 = arith.constant dense<0.000000e+00> : vector<24x16xf32>
    %73 = tpu.matmul %71, %72, %cst_71 {dimension_numbers = #tpu.dot_dimension_numbers<[1], [0], [0], [1], [0, 0, 1, 1], [], []>} : vector<24x36xf32>, vector<36x16xf32>, vector<24x16xf32> -> vector<24x16xf32>
    %c0_72 = arith.constant 0 : index
    %c0_73 = arith.constant 0 : index
    %74 = vector.load %arg15[%c0_72, %c0_73] : memref<1x16xf32, #tpu.memory_space<vmem>>, vector<1x16xf32>
    %75 = vector.broadcast %74 : vector<1x16xf32> to vector<24x16xf32>
    %76 = arith.addf %73, %75 : vector<24x16xf32>
    %c0_74 = arith.constant 0 : index
    %c0_75 = arith.constant 0 : index
    %77 = vector.load %arg18[%c0_74, %c0_75] : memref<1x16xf32, #tpu.memory_space<vmem>>, vector<1x16xf32>
    %c0_76 = arith.constant 0 : index
    %c0_77 = arith.constant 0 : index
    %78 = vector.load %arg19[%c0_76, %c0_77] : memref<1x16xf32, #tpu.memory_space<vmem>>, vector<1x16xf32>
    %79 = tpu.iota {dimensions = array<i32: 1>} : vector<24x16xi32>
    %c8_i32_78 = arith.constant 8 : i32
    %80 = vector.broadcast %c8_i32_78 : i32 to vector<24x16xi32>
    %81 = arith.cmpi sge, %79, %80 : vector<24x16xi32>
    %cst_79 = arith.constant 0.000000e+00 : f32
    %82 = vector.broadcast %cst_79 : f32 to vector<24x16xf32>
    %83 = arith.maximumf %76, %82 : vector<24x16xf32>
    %84 = arith.select %81, %83, %76 : vector<24x16xi1>, vector<24x16xf32>
    %cst_80 = arith.constant dense<0.000000e+00> : vector<16xf32>
    %85 = vector.multi_reduction <add>, %84, %cst_80 [0] : vector<24x16xf32> to vector<16xf32>
    %86 = vector.shape_cast %85 : vector<16xf32> to vector<1x16xf32>
    %cst_81 = arith.constant 2.400000e+01 : f32
    %87 = vector.broadcast %cst_81 : f32 to vector<1x16xf32>
    %88 = arith.divf %86, %87 : vector<1x16xf32>
    %89 = vector.broadcast %88 : vector<1x16xf32> to vector<24x16xf32>
    %90 = arith.subf %84, %89 : vector<24x16xf32>
    %91 = arith.mulf %90, %90 : vector<24x16xf32>
    %cst_82 = arith.constant dense<0.000000e+00> : vector<16xf32>
    %92 = vector.multi_reduction <add>, %91, %cst_82 [0] : vector<24x16xf32> to vector<16xf32>
    %93 = vector.shape_cast %92 : vector<16xf32> to vector<1x16xf32>
    %cst_83 = arith.constant 2.400000e+01 : f32
    %94 = vector.broadcast %cst_83 : f32 to vector<1x16xf32>
    %95 = arith.divf %93, %94 : vector<1x16xf32>
    %96 = vector.broadcast %88 : vector<1x16xf32> to vector<24x16xf32>
    %97 = arith.subf %84, %96 : vector<24x16xf32>
    %cst_84 = arith.constant 9.99999974E-6 : f32
    %98 = vector.broadcast %cst_84 : f32 to vector<1x16xf32>
    %99 = arith.addf %95, %98 : vector<1x16xf32>
    %100 = math.rsqrt %99 : vector<1x16xf32>
    %101 = vector.broadcast %100 : vector<1x16xf32> to vector<24x16xf32>
    %102 = arith.mulf %97, %101 : vector<24x16xf32>
    %103 = vector.broadcast %77 : vector<1x16xf32> to vector<24x16xf32>
    %104 = arith.mulf %102, %103 : vector<24x16xf32>
    %105 = vector.broadcast %78 : vector<1x16xf32> to vector<24x16xf32>
    %106 = arith.addf %104, %105 : vector<24x16xf32>
    %c0_85 = arith.constant 0 : index
    %c0_86 = arith.constant 0 : index
    %107 = vector.load %arg21[%c0_85, %c0_86] : memref<24x16xf32, #tpu.memory_space<vmem>>, vector<24x16xf32>
    tpu.vector_store %arg21[%c0_85, %c0_86], %106 {strides = array<i32>} : memref<24x16xf32, #tpu.memory_space<vmem>>, vector<24x16xf32>,
    return
  }
}

</mosaic_0001>

<llo_original>
// kernel: gnn_forward.3
$region0: #{gnn_forward.3}
  #allocation0 [shape = 'u32[]', space=smem, size = 0x4, offset = 0x4, fixed_abs, tag = 'smem constant byte address 0x4 - core index']
  #allocation1 [shape = 'u32[144,128]{1,0:T(1,128)}', space=vmem, size = 0x12000, scoped, tag = 'internal scratch']
  #allocation2 [shape = 'f32[16,96]{1,0:T(8,128)}', space=vmem, size = 0x2000, scoped, tag = 'scratch operand']
  %s0 = inlined_call_operand.vmem [shape: f32[16,16], index: 0, kind: input, shape index: {}]
  %s1 = inlined_call_operand.vmem [shape: f32[24,16], index: 1, kind: input, shape index: {}]
  %s2 = inlined_call_operand.vmem [shape: f32[16,1], index: 2, kind: input, shape index: {}]
  %s3 = inlined_call_operand.vmem [shape: f32[16,16], index: 3, kind: input, shape index: {}]
  %s4 = inlined_call_operand.vmem [shape: f32[16,16], index: 4, kind: input, shape index: {}]
  %s5 = inlined_call_operand.vmem [shape: f32[16,24], index: 5, kind: input, shape index: {}]
  %s6 = inlined_call_operand.vmem [shape: f32[16,24], index: 6, kind: input, shape index: {}]
  %s7 = inlined_call_operand.vmem [shape: f32[96,8], index: 7, kind: input, shape index: {}]
  %s8 = inlined_call_operand.vmem [shape: f32[1,8], index: 8, kind: input, shape index: {}]
  %s9 = inlined_call_operand.vmem [shape: f32[16,8], index: 9, kind: output, shape index: {}]
  %s10 = sld [smem:[#allocation0]]
  $region46: #{gnn_forward.3} parent=0
    _
  %s12 = ssub.s32 1, %s10
  %s13 = scalar_select 0, %s12, %s10
  // Predicated region
  $region2: #{gnn_forward.3} parent=0 // pred_check
    _
  $region3: #{gnn_forward.3} parent=0 // pred_check_branch
    %15 = sbr.rel (0) target = $region5
  $region4: #{gnn_forward.3} parent=0 // pred_region
    _
  $region5: #{gnn_forward.3} parent=0 // pred_fallthru
    _
  // Predicated region
  $region6: #{gnn_forward.3} parent=0 // pred_check
    _
  $region7: #{gnn_forward.3} parent=0 // pred_check_branch
    %17 = sbr.rel (0) target = $region9
  $region8: #{gnn_forward.3} parent=0 // pred_region
    _
  $region9: #{gnn_forward.3} parent=0 // pred_fallthru
    _
  // Predicated region
  $region10: #{gnn_forward.3} parent=0 // pred_check
    _
  $region11: #{gnn_forward.3} parent=0 // pred_check_branch
    %19 = sbr.rel (0) target = $region13
  $region12: #{gnn_forward.3} parent=0 // pred_region
    _
  $region13: #{gnn_forward.3} parent=0 // pred_fallthru
    _
  // Predicated region
  $region14: #{gnn_forward.3} parent=0 // pred_check
    _
  $region15: #{gnn_forward.3} parent=0 // pred_check_branch
    %21 = sbr.rel (0) target = $region17
  $region16: #{gnn_forward.3} parent=0 // pred_region
    _
  $region17: #{gnn_forward.3} parent=0 // pred_fallthru
    _
  // Predicated region
  $region18: #{gnn_forward.3} parent=0 // pred_check
    _
  $region19: #{gnn_forward.3} parent=0 // pred_check_branch
    %23 = sbr.rel (0) target = $region21
  $region20: #{gnn_forward.3} parent=0 // pred_region
    _
  $region21: #{gnn_forward.3} parent=0 // pred_fallthru
    _
  // Predicated region
  $region22: #{gnn_forward.3} parent=0 // pred_check
    _
  $region23: #{gnn_forward.3} parent=0 // pred_check_branch
    %25 = sbr.rel (0) target = $region25
  $region24: #{gnn_forward.3} parent=0 // pred_region
    _
  $region25: #{gnn_forward.3} parent=0 // pred_fallthru
    _
  // Predicated region
  $region26: #{gnn_forward.3} parent=0 // pred_check
    _
  $region27: #{gnn_forward.3} parent=0 // pred_check_branch
    %27 = sbr.rel (0) target = $region29
  $region28: #{gnn_forward.3} parent=0 // pred_region
    _
  $region29: #{gnn_forward.3} parent=0 // pred_fallthru
    _
  // Predicated region
  $region30: #{gnn_forward.3} parent=0 // pred_check
    _
  $region31: #{gnn_forward.3} parent=0 // pred_check_branch
    %29 = sbr.rel (0) target = $region33
  $region32: #{gnn_forward.3} parent=0 // pred_region
    _
  $region33: #{gnn_forward.3} parent=0 // pred_fallthru
    _
  // Predicated region
  $region34: #{gnn_forward.3} parent=0 // pred_check
    _
  $region35: #{gnn_forward.3} parent=0 // pred_check_branch
    %31 = sbr.rel (0) target = $region37
  $region36: #{gnn_forward.3} parent=0 // pred_region
    _
  $region37: #{gnn_forward.3} parent=0 // pred_fallthru
    _
  %v32 = vld [vmem:[%s0] sm:$0xff]
  %v33 = vld [vmem:[%s0 + $0x8] sm:$0xff]
  %v34 = vld [vmem:[%s1] sm:$0xff]
  %v35 = vld [vmem:[%s1 + $0x8] sm:$0xff]
  %v36 = vld [vmem:[%s1 + $0x10] sm:$0xff]
  %v37 = vld [vmem:[%s5] sm:$0xff]
  %v38 = vld [vmem:[%s5 + $0x8] sm:$0xff]
  %vm39 = vcmask 195584
  %v41 = vsel %vm39, %v37, 0
  %v44 = vsel %vm39, %v38, 0
  %46 = vmatprep.subr.mxu0 0.0
  %47 = vmatpush1.msra.mxu0 %v34
  %48 = vmatprep.subr.mxu0 0.0
  %49 = vmatpush1.msra.mxu0 %v35
  %50 = vmatprep.subr.mxu0 0.0
  %51 = vmatpush1.msra.mxu0 %v36
  %52 = vmatprep.subr.mxu0 0.0
  %53 = vmatpush1.msra.mxu0 0.0
  %54 = vmatprep.subr.mxu0 0.0
  %55 = vmatpush1.msra.mxu0 0.0
  %56 = vmatprep.subr.mxu0 0.0
  %57 = vmatpush1.msra.mxu0 0.0
  %58 = vmatprep.subr.mxu0 0.0
  %59 = vmatpush1.msra.mxu0 0.0
  %60 = vmatprep.subr.mxu0 0.0
  %61 = vmatpush1.msra.mxu0 0.0
  %62 = vmatprep.subr.mxu0 0.0
  %63 = vmatpush1.msra.mxu0 0.0
  %64 = vmatprep.subr.mxu0 0.0
  %65 = vmatpush1.msra.mxu0 0.0
  %66 = vmatprep.subr.mxu0 0.0
  %67 = vmatpush1.msra.mxu0 0.0
  %68 = vmatprep.subr.mxu0 0.0
  %69 = vmatpush1.msra.mxu0 0.0
  %70 = vmatprep.subr.mxu0 0.0
  %71 = vmatpush1.msra.mxu0 0.0
  %72 = vmatprep.subr.mxu0 0.0
  %73 = vmatpush1.msra.mxu0 0.0
  %74 = vmatprep.subr.mxu0 0.0
  %75 = vmatpush1.msra.mxu0 0.0
  %76 = vmatprep.subr.mxu0 0.0
  %77 = vmatpush1.msra.mxu0 0.0
  %78 = vmatprep.subr.mxu0 0.0
  %79 = vmatpush1.msra.mxu0 0.0
  %80 = vmatprep.subr.mxu0 0.0
  %81 = vmatpush1.msra.mxu0 0.0
  %82 = vmatprep.subr.mxu0 0.0
  %83 = vmatpush1.msra.mxu0 0.0
  %84 = vmatprep.subr.mxu0 0.0
  %85 = vmatpush1.msra.mxu0 0.0
  %86 = vmatprep.subr.mxu0 0.0
  %87 = vmatpush1.msra.mxu0 0.0
  %88 = vmatprep.subr.mxu0 0.0
  %89 = vmatpush1.msra.mxu0 0.0
  %90 = vmatprep.subr.mxu0 0.0
  %91 = vmatpush1.msra.mxu0 0.0
  %92 = vmatprep.subr.mxu0 0.0
  %93 = vmatpush1.msra.mxu0 0.0
  %94 = vmatprep.subr.mxu0 0.0
  %95 = vmatpush1.msra.mxu0 0.0
  %96 = vmatprep.subr.mxu0 0.0
  %97 = vmatpush1.msra.mxu0 0.0
  %98 = vmatprep.subr.mxu0 0.0
  %99 = vmatpush1.msra.mxu0 0.0
  %100 = vmatprep.subr.mxu0 0.0
  %101 = vmatpush1.msra.mxu0 0.0
  %102 = vmatprep.subr.mxu0 0.0
  %103 = vmatpush1.msra.mxu0 0.0
  %104 = vmatprep.subr.mxu0 0.0
  %105 = vmatpush1.msra.mxu0 0.0
  %106 = vmatprep.subr.mxu0 0.0
  %107 = vmatpush1.msra.mxu0 0.0
  %108 = vmatprep.subr.mxu0 0.0
  %109 = vmatpush1.msra.mxu0 0.0
  %110 = vmatprep.mubr.f32.mxu0 0.0
  %111 = vmatmul.mubr.f32.gmra.mrb[0].mxu0 %v41
  %v112 = vpop.f32.mrb[0].mxu0
  %v113 = vadd.f32 0.0, %v112
  %v114 = vpop.f32.mrb[0].mxu0
  %115 = vmatprep.mubr.f32.mxu0 0.0
  %116 = vmatmul.mubr.f32.gmra.mrb[0].mxu0 %v44
  %v117 = vpop.f32.mrb[0].mxu0
  %v118 = vadd.f32 0.0, %v117
  %v119 = vpop.f32.mrb[0].mxu0
  %120 = vdwg.mxu0
  %v121 = vld [vmem:[%s6] sm:$0xff]
  %v122 = vld [vmem:[%s6 + $0x8] sm:$0xff]
  %v124 = vsel %vm39, %v121, 0
  %v127 = vsel %vm39, %v122, 0
  %129 = vmatprep.subr.mxu0 0.0
  %130 = vmatpush1.msra.mxu0 %v34
  %131 = vmatprep.subr.mxu0 0.0
  %132 = vmatpush1.msra.mxu0 %v35
  %133 = vmatprep.subr.mxu0 0.0
  %134 = vmatpush1.msra.mxu0 %v36
  %135 = vmatprep.subr.mxu0 0.0
  %136 = vmatpush1.msra.mxu0 0.0
  %137 = vmatprep.subr.mxu0 0.0
  %138 = vmatpush1.msra.mxu0 0.0
  %139 = vmatprep.subr.mxu0 0.0
  %140 = vmatpush1.msra.mxu0 0.0
  %141 = vmatprep.subr.mxu0 0.0
  %142 = vmatpush1.msra.mxu0 0.0
  %143 = vmatprep.subr.mxu0 0.0
  %144 = vmatpush1.msra.mxu0 0.0
  %145 = vmatprep.subr.mxu0 0.0
  %146 = vmatpush1.msra.mxu0 0.0
  %147 = vmatprep.subr.mxu0 0.0
  %148 = vmatpush1.msra.mxu0 0.0
  %149 = vmatprep.subr.mxu0 0.0
  %150 = vmatpush1.msra.mxu0 0.0
  %151 = vmatprep.subr.mxu0 0.0
  %152 = vmatpush1.msra.mxu0 0.0
  %153 = vmatprep.subr.mxu0 0.0
  %154 = vmatpush1.msra.mxu0 0.0
  %155 = vmatprep.subr.mxu0 0.0
  %156 = vmatpush1.msra.mxu0 0.0
  %157 = vmatprep.subr.mxu0 0.0
  %158 = vmatpush1.msra.mxu0 0.0
  %159 = vmatprep.subr.mxu0 0.0
  %160 = vmatpush1.msra.mxu0 0.0
  %161 = vmatprep.subr.mxu0 0.0
  %162 = vmatpush1.msra.mxu0 0.0
  %163 = vmatprep.subr.mxu0 0.0
  %164 = vmatpush1.msra.mxu0 0.0
  %165 = vmatprep.subr.mxu0 0.0
  %166 = vmatpush1.msra.mxu0 0.0
  %167 = vmatprep.subr.mxu0 0.0
  %168 = vmatpush1.msra.mxu0 0.0
  %169 = vmatprep.subr.mxu0 0.0
  %170 = vmatpush1.msra.mxu0 0.0
  %171 = vmatprep.subr.mxu0 0.0
  %172 = vmatpush1.msra.mxu0 0.0
  %173 = vmatprep.subr.mxu0 0.0
  %174 = vmatpush1.msra.mxu0 0.0
  %175 = vmatprep.subr.mxu0 0.0
  %176 = vmatpush1.msra.mxu0 0.0
  %177 = vmatprep.subr.mxu0 0.0
  %178 = vmatpush1.msra.mxu0 0.0
  %179 = vmatprep.subr.mxu0 0.0
  %180 = vmatpush1.msra.mxu0 0.0
  %181 = vmatprep.subr.mxu0 0.0
  %182 = vmatpush1.msra.mxu0 0.0
  %183 = vmatprep.subr.mxu0 0.0
  %184 = vmatpush1.msra.mxu0 0.0
  %185 = vmatprep.subr.mxu0 0.0
  %186 = vmatpush1.msra.mxu0 0.0
  %187 = vmatprep.subr.mxu0 0.0
  %188 = vmatpush1.msra.mxu0 0.0
  %189 = vmatprep.subr.mxu0 0.0
  %190 = vmatpush1.msra.mxu0 0.0
  %191 = vmatprep.subr.mxu0 0.0
  %192 = vmatpush1.msra.mxu0 0.0
  %193 = vmatprep.mubr.f32.mxu0 0.0
  %194 = vmatmul.mubr.f32.gmra.mrb[0].mxu0 %v124
  %v195 = vpop.f32.mrb[0].mxu0
  %v196 = vadd.f32 0.0, %v195
  %v197 = vpop.f32.mrb[0].mxu0
  %198 = vmatprep.mubr.f32.mxu0 0.0
  %199 = vmatmul.mubr.f32.gmra.mrb[0].mxu0 %v127
  %v200 = vpop.f32.mrb[0].mxu0
  %v201 = vadd.f32 0.0, %v200
  %v202 = vpop.f32.mrb[0].mxu0
  %203 = vdwg.mxu0
  %v204 = vld [vmem:[%s3] sm:$0xff]
  %v205 = vld [vmem:[%s3 + $0x8] sm:$0xff]
  %vm206 = vcmask 130048
  %v208 = vsel %vm206, %v204, 0
  %v211 = vsel %vm206, %v205, 0
  %213 = vmatprep.subr.mxu0 0.0
  %214 = vmatpush1.msra.mxu0 %v32
  %215 = vmatprep.subr.mxu0 0.0
  %216 = vmatpush1.msra.mxu0 %v33
  %217 = vmatprep.subr.mxu0 0.0
  %218 = vmatpush1.msra.mxu0 0.0
  %219 = vmatprep.subr.mxu0 0.0
  %220 = vmatpush1.msra.mxu0 0.0
  %221 = vmatprep.subr.mxu0 0.0
  %222 = vmatpush1.msra.mxu0 0.0
  %223 = vmatprep.subr.mxu0 0.0
  %224 = vmatpush1.msra.mxu0 0.0
  %225 = vmatprep.subr.mxu0 0.0
  %226 = vmatpush1.msra.mxu0 0.0
  %227 = vmatprep.subr.mxu0 0.0
  %228 = vmatpush1.msra.mxu0 0.0
  %229 = vmatprep.subr.mxu0 0.0
  %230 = vmatpush1.msra.mxu0 0.0
  %231 = vmatprep.subr.mxu0 0.0
  %232 = vmatpush1.msra.mxu0 0.0
  %233 = vmatprep.subr.mxu0 0.0
  %234 = vmatpush1.msra.mxu0 0.0
  %235 = vmatprep.subr.mxu0 0.0
  %236 = vmatpush1.msra.mxu0 0.0
  %237 = vmatprep.subr.mxu0 0.0
  %238 = vmatpush1.msra.mxu0 0.0
  %239 = vmatprep.subr.mxu0 0.0
  %240 = vmatpush1.msra.mxu0 0.0
  %241 = vmatprep.subr.mxu0 0.0
  %242 = vmatpush1.msra.mxu0 0.0
  %243 = vmatprep.subr.mxu0 0.0
  %244 = vmatpush1.msra.mxu0 0.0
  %245 = vmatprep.subr.mxu0 0.0
  %246 = vmatpush1.msra.mxu0 0.0
  %247 = vmatprep.subr.mxu0 0.0
  %248 = vmatpush1.msra.mxu0 0.0
  %249 = vmatprep.subr.mxu0 0.0
  %250 = vmatpush1.msra.mxu0 0.0
  %251 = vmatprep.subr.mxu0 0.0
  %252 = vmatpush1.msra.mxu0 0.0
  %253 = vmatprep.subr.mxu0 0.0
  %254 = vmatpush1.msra.mxu0 0.0
  %255 = vmatprep.subr.mxu0 0.0
  %256 = vmatpush1.msra.mxu0 0.0
  %257 = vmatprep.subr.mxu0 0.0
  %258 = vmatpush1.msra.mxu0 0.0
  %259 = vmatprep.subr.mxu0 0.0
  %260 = vmatpush1.msra.mxu0 0.0
  %261 = vmatprep.subr.mxu0 0.0
  %262 = vmatpush1.msra.mxu0 0.0
  %263 = vmatprep.subr.mxu0 0.0
  %264 = vmatpush1.msra.mxu0 0.0
  %265 = vmatprep.subr.mxu0 0.0
  %266 = vmatpush1.msra.mxu0 0.0
  %267 = vmatprep.subr.mxu0 0.0
  %268 = vmatpush1.msra.mxu0 0.0
  %269 = vmatprep.subr.mxu0 0.0
  %270 = vmatpush1.msra.mxu0 0.0
  %271 = vmatprep.subr.mxu0 0.0
  %272 = vmatpush1.msra.mxu0 0.0
  %273 = vmatprep.subr.mxu0 0.0
  %274 = vmatpush1.msra.mxu0 0.0
  %275 = vmatprep.subr.mxu0 0.0
  %276 = vmatpush1.msra.mxu0 0.0
  %277 = vmatprep.mubr.f32.mxu0 0.0
  %278 = vmatmul.mubr.f32.gmra.mrb[0].mxu0 %v208
  %v279 = vpop.f32.mrb[0].mxu0
  %v280 = vadd.f32 0.0, %v279
  %v281 = vpop.f32.mrb[0].mxu0
  %282 = vmatprep.mubr.f32.mxu0 0.0
  %283 = vmatmul.mubr.f32.gmra.mrb[0].mxu0 %v211
  %v284 = vpop.f32.mrb[0].mxu0
  %v285 = vadd.f32 0.0, %v284
  %v286 = vpop.f32.mrb[0].mxu0
  %287 = vdwg.mxu0
  %v288 = vld [vmem:[%s4] sm:$0xff]
  %v289 = vld [vmem:[%s4 + $0x8] sm:$0xff]
  %v291 = vsel %vm206, %v288, 0
  %v294 = vsel %vm206, %v289, 0
  %296 = vmatprep.subr.mxu0 0.0
  %297 = vmatpush1.msra.mxu0 %v32
  %298 = vmatprep.subr.mxu0 0.0
  %299 = vmatpush1.msra.mxu0 %v33
  %300 = vmatprep.subr.mxu0 0.0
  %301 = vmatpush1.msra.mxu0 0.0
  %302 = vmatprep.subr.mxu0 0.0
  %303 = vmatpush1.msra.mxu0 0.0
  %304 = vmatprep.subr.mxu0 0.0
  %305 = vmatpush1.msra.mxu0 0.0
  %306 = vmatprep.subr.mxu0 0.0
  %307 = vmatpush1.msra.mxu0 0.0
  %308 = vmatprep.subr.mxu0 0.0
  %309 = vmatpush1.msra.mxu0 0.0
  %310 = vmatprep.subr.mxu0 0.0
  %311 = vmatpush1.msra.mxu0 0.0
  %312 = vmatprep.subr.mxu0 0.0
  %313 = vmatpush1.msra.mxu0 0.0
  %314 = vmatprep.subr.mxu0 0.0
  %315 = vmatpush1.msra.mxu0 0.0
  %316 = vmatprep.subr.mxu0 0.0
  %317 = vmatpush1.msra.mxu0 0.0
  %318 = vmatprep.subr.mxu0 0.0
  %319 = vmatpush1.msra.mxu0 0.0
  %320 = vmatprep.subr.mxu0 0.0
  %321 = vmatpush1.msra.mxu0 0.0
  %322 = vmatprep.subr.mxu0 0.0
  %323 = vmatpush1.msra.mxu0 0.0
  %324 = vmatprep.subr.mxu0 0.0
  %325 = vmatpush1.msra.mxu0 0.0
  %326 = vmatprep.subr.mxu0 0.0
  %327 = vmatpush1.msra.mxu0 0.0
  %328 = vmatprep.subr.mxu0 0.0
  %329 = vmatpush1.msra.mxu0 0.0
  %330 = vmatprep.subr.mxu0 0.0
  %331 = vmatpush1.msra.mxu0 0.0
  %332 = vmatprep.subr.mxu0 0.0
  %333 = vmatpush1.msra.mxu0 0.0
  %334 = vmatprep.subr.mxu0 0.0
  %335 = vmatpush1.msra.mxu0 0.0
  %336 = vmatprep.subr.mxu0 0.0
  %337 = vmatpush1.msra.mxu0 0.0
  %338 = vmatprep.subr.mxu0 0.0
  %339 = vmatpush1.msra.mxu0 0.0
  %340 = vmatprep.subr.mxu0 0.0
  %341 = vmatpush1.msra.mxu0 0.0
  %342 = vmatprep.subr.mxu0 0.0
  %343 = vmatpush1.msra.mxu0 0.0
  %344 = vmatprep.subr.mxu0 0.0
  %345 = vmatpush1.msra.mxu0 0.0
  %346 = vmatprep.subr.mxu0 0.0
  %347 = vmatpush1.msra.mxu0 0.0
  %348 = vmatprep.subr.mxu0 0.0
  %349 = vmatpush1.msra.mxu0 0.0
  %350 = vmatprep.subr.mxu0 0.0
  %351 = vmatpush1.msra.mxu0 0.0
  %352 = vmatprep.subr.mxu0 0.0
  %353 = vmatpush1.msra.mxu0 0.0
  %354 = vmatprep.subr.mxu0 0.0
  %355 = vmatpush1.msra.mxu0 0.0
  %356 = vmatprep.subr.mxu0 0.0
  %357 = vmatpush1.msra.mxu0 0.0
  %358 = vmatprep.subr.mxu0 0.0
  %359 = vmatpush1.msra.mxu0 0.0
  %360 = vmatprep.mubr.f32.mxu0 0.0
  %361 = vmatmul.mubr.f32.gmra.mrb[0].mxu0 %v291
  %v362 = vpop.f32.mrb[0].mxu0
  %v363 = vadd.f32 0.0, %v362
  %v364 = vpop.f32.mrb[0].mxu0
  %365 = vmatprep.mubr.f32.mxu0 0.0
  %366 = vmatmul.mubr.f32.gmra.mrb[0].mxu0 %v294
  %v367 = vpop.f32.mrb[0].mxu0
  %v368 = vadd.f32 0.0, %v367
  %v369 = vpop.f32.mrb[0].mxu0
  %370 = vdwg.mxu0
  %v371 = vld [vmem:[%s2] sm:$0xff]
  %v372 = vld [vmem:[%s2 + $0x8] sm:$0xff]
  %374 = vset.pattern.permute.xlu0 0
  %375 = vperm.xlu0 %374, %v371
  %v376 = vpop.permute.xlu0 %375
  %379 = vset.pattern.permute.xlu0 0
  %380 = vperm.xlu0 %379, %v372
  %v381 = vpop.permute.xlu0 %380
  %v383 = vmul.f32 %v376, %v32
  %v384 = vmul.f32 %v381, %v33
  %385 = vst.msk [vmem:[#allocation2] sm:$0xff] %vm206, %v32
  %386 = vst.msk [vmem:[#allocation2 + $0x8] sm:$0xff] %vm206, %v33
  %389 = vrot.lane.b32.xlu0 %v383, 16
  %v390 = vpop.permute.xlu0 %389
  %391 = vrot.lane.b32.xlu0 %v384, 16
  %v392 = vpop.permute.xlu0 %391
  %vm395 = vcmask 261248
  %396 = vst.msk [vmem:[#allocation2] sm:$0xff] %vm395, %v390
  %397 = vst.msk [vmem:[#allocation2 + $0x8] sm:$0xff] %vm395, %v392
  %400 = vrot.lane.b32.xlu0 %v280, 32
  %v401 = vpop.permute.xlu0 %400
  %402 = vrot.lane.b32.xlu0 %v285, 32
  %v403 = vpop.permute.xlu0 %402
  %vm406 = vcmask 392448
  %407 = vst.msk [vmem:[#allocation2] sm:$0xff] %vm406, %v401
  %408 = vst.msk [vmem:[#allocation2 + $0x8] sm:$0xff] %vm406, %v403
  %411 = vrot.lane.b32.xlu0 %v363, 48
  %v412 = vpop.permute.xlu0 %411
  %413 = vrot.lane.b32.xlu0 %v368, 48
  %v414 = vpop.permute.xlu0 %413
  %vm417 = vcmask 523648
  %418 = vst.msk [vmem:[#allocation2] sm:$0xff] %vm417, %v412
  %419 = vst.msk [vmem:[#allocation2 + $0x8] sm:$0xff] %vm417, %v414
  %422 = vrot.lane.b32.xlu0 %v113, 64
  %v423 = vpop.permute.xlu0 %422
  %424 = vrot.lane.b32.xlu0 %v118, 64
  %v425 = vpop.permute.xlu0 %424
  %vm428 = vcmask 654848
  %429 = vst.msk [vmem:[#allocation2] sm:$0xff] %vm428, %v423
  %430 = vst.msk [vmem:[#allocation2 + $0x8] sm:$0xff] %vm428, %v425
  %433 = vrot.lane.b32.xlu0 %v196, 80
  %v434 = vpop.permute.xlu0 %433
  %435 = vrot.lane.b32.xlu0 %v201, 80
  %v436 = vpop.permute.xlu0 %435
  %vm439 = vcmask 786048
  %440 = vst.msk [vmem:[#allocation2] sm:$0xff] %vm439, %v434
  %441 = vst.msk [vmem:[#allocation2 + $0x8] sm:$0xff] %vm439, %v436
  %v442 = vld [vmem:[#allocation2] sm:$0xff]
  %v443 = vld [vmem:[#allocation2 + $0x8] sm:$0xff]
  %v444 = vld [vmem:[%s7] sm:$0xff]
  %v445 = vld [vmem:[%s7 + $0x8] sm:$0xff]
  %v446 = vld [vmem:[%s7 + $0x10] sm:$0xff]
  %v447 = vld [vmem:[%s7 + $0x18] sm:$0xff]
  %v448 = vld [vmem:[%s7 + $0x20] sm:$0xff]
  %v449 = vld [vmem:[%s7 + $0x28] sm:$0xff]
  %v450 = vld [vmem:[%s7 + $0x30] sm:$0xff]
  %v451 = vld [vmem:[%s7 + $0x38] sm:$0xff]
  %v452 = vld [vmem:[%s7 + $0x40] sm:$0xff]
  %v453 = vld [vmem:[%s7 + $0x48] sm:$0xff]
  %v454 = vld [vmem:[%s7 + $0x50] sm:$0xff]
  %v455 = vld [vmem:[%s7 + $0x58] sm:$0xff]
  %v456 = vld [vmem:[%s8] sm:$0x1]
  %v458 = vlaneseq
  %v459 = vshrl.u32 %v458, 7
  %v460 = vsub.s32 0, %v459
  %v461 = vrot.slane %v456, %v460
  %vm463 = vcmask 785408
  %v465 = vsel %vm463, %v442, 0
  %v468 = vsel %vm463, %v443, 0
  %470 = vmatprep.subr.mxu0 0.0
  %471 = vmatpush1.msra.mxu0 %v444
  %472 = vmatprep.subr.mxu0 0.0
  %473 = vmatpush1.msra.mxu0 %v445
  %474 = vmatprep.subr.mxu0 0.0
  %475 = vmatpush1.msra.mxu0 %v446
  %476 = vmatprep.subr.mxu0 0.0
  %477 = vmatpush1.msra.mxu0 %v447
  %478 = vmatprep.subr.mxu0 0.0
  %479 = vmatpush1.msra.mxu0 %v448
  %480 = vmatprep.subr.mxu0 0.0
  %481 = vmatpush1.msra.mxu0 %v449
  %482 = vmatprep.subr.mxu0 0.0
  %483 = vmatpush1.msra.mxu0 %v450
  %484 = vmatprep.subr.mxu0 0.0
  %485 = vmatpush1.msra.mxu0 %v451
  %486 = vmatprep.subr.mxu0 0.0
  %487 = vmatpush1.msra.mxu0 %v452
  %488 = vmatprep.subr.mxu0 0.0
  %489 = vmatpush1.msra.mxu0 %v453
  %490 = vmatprep.subr.mxu0 0.0
  %491 = vmatpush1.msra.mxu0 %v454
  %492 = vmatprep.subr.mxu0 0.0
  %493 = vmatpush1.msra.mxu0 %v455
  %494 = vmatprep.subr.mxu0 0.0
  %495 = vmatpush1.msra.mxu0 0.0
  %496 = vmatprep.subr.mxu0 0.0
  %497 = vmatpush1.msra.mxu0 0.0
  %498 = vmatprep.subr.mxu0 0.0
  %499 = vmatpush1.msra.mxu0 0.0
  %500 = vmatprep.subr.mxu0 0.0
  %501 = vmatpush1.msra.mxu0 0.0
  %502 = vmatprep.subr.mxu0 0.0
  %503 = vmatpush1.msra.mxu0 0.0
  %504 = vmatprep.subr.mxu0 0.0
  %505 = vmatpush1.msra.mxu0 0.0
  %506 = vmatprep.subr.mxu0 0.0
  %507 = vmatpush1.msra.mxu0 0.0
  %508 = vmatprep.subr.mxu0 0.0
  %509 = vmatpush1.msra.mxu0 0.0
  %510 = vmatprep.subr.mxu0 0.0
  %511 = vmatpush1.msra.mxu0 0.0
  %512 = vmatprep.subr.mxu0 0.0
  %513 = vmatpush1.msra.mxu0 0.0
  %514 = vmatprep.subr.mxu0 0.0
  %515 = vmatpush1.msra.mxu0 0.0
  %516 = vmatprep.subr.mxu0 0.0
  %517 = vmatpush1.msra.mxu0 0.0
  %518 = vmatprep.subr.mxu0 0.0
  %519 = vmatpush1.msra.mxu0 0.0
  %520 = vmatprep.subr.mxu0 0.0
  %521 = vmatpush1.msra.mxu0 0.0
  %522 = vmatprep.subr.mxu0 0.0
  %523 = vmatpush1.msra.mxu0 0.0
  %524 = vmatprep.subr.mxu0 0.0
  %525 = vmatpush1.msra.mxu0 0.0
  %526 = vmatprep.subr.mxu0 0.0
  %527 = vmatpush1.msra.mxu0 0.0
  %528 = vmatprep.subr.mxu0 0.0
  %529 = vmatpush1.msra.mxu0 0.0
  %530 = vmatprep.subr.mxu0 0.0
  %531 = vmatpush1.msra.mxu0 0.0
  %532 = vmatprep.subr.mxu0 0.0
  %533 = vmatpush1.msra.mxu0 0.0
  %534 = vmatprep.mubr.f32.mxu0 0.0
  %535 = vmatmul.mubr.f32.gmra.mrb[0].mxu0 %v465
  %v536 = vpop.f32.mrb[0].mxu0
  %v537 = vadd.f32 %v461, %v536
  %v538 = vpop.f32.mrb[0].mxu0
  %539 = vmatprep.mubr.f32.mxu0 0.0
  %540 = vmatmul.mubr.f32.gmra.mrb[0].mxu0 %v468
  %v541 = vpop.f32.mrb[0].mxu0
  %v542 = vadd.f32 %v461, %v541
  %v543 = vpop.f32.mrb[0].mxu0
  %544 = vdwg.mxu0
  %vm545 = vcmask 64512
  %546 = vst.msk [vmem:[%s9] sm:$0xff] %vm545, %v537
  %547 = vst.msk [vmem:[%s9 + $0x8] sm:$0xff] %vm545, %v542
  // Predicated region
  $region38: #{gnn_forward.3} parent=0 // pred_check
    _
  $region39: #{gnn_forward.3} parent=0 // pred_check_branch
    %549 = sbr.rel (0) target = $region41
  $region40: #{gnn_forward.3} parent=0 // pred_region
    _
  $region41: #{gnn_forward.3} parent=0 // pred_fallthru
    _
  // Predicated region
  $region42: #{gnn_forward.3} parent=0 // pred_check
    _
  $region43: #{gnn_forward.3} parent=0 // pred_check_branch
    %551 = sbr.rel (0) target = $region45
  $region44: #{gnn_forward.3} parent=0 // pred_region
    _
  $region45: #{gnn_forward.3} parent=0 // pred_fallthru
    _

// kernel: gnn_forward.2
$region0: #{gnn_forward.2}
  #allocation0 [shape = 'u32[]', space=smem, size = 0x4, offset = 0x4, fixed_abs, tag = 'smem constant byte address 0x4 - core index']
  #allocation1 [shape = 'u32[144,128]{1,0:T(1,128)}', space=vmem, size = 0x12000, scoped, tag = 'internal scratch']
  #allocation2 [shape = 'f32[16,6]{1,0:T(8,128)}', space=vmem, size = 0x2000, scoped, tag = 'scratch operand']
  #allocation3 [shape = 'f32[24,36]{1,0:T(8,128)}', space=vmem, size = 0x3000, scoped, tag = 'scratch operand']
  %s0 = inlined_call_operand.vmem [shape: f32[16,1], index: 0, kind: input, shape index: {}, may-alias: {0,2}]
  %s1 = inlined_call_operand.vmem [shape: f32[24,1], index: 1, kind: input, shape index: {}, may-alias: {1,3}]
  %s2 = inlined_call_operand.vmem [shape: f32[16,1], index: 2, kind: input, shape index: {}, may-alias: {0,2}]
  %s3 = inlined_call_operand.vmem [shape: f32[24,1], index: 3, kind: input, shape index: {}, may-alias: {1,3}]
  %s4 = inlined_call_operand.vmem [shape: f32[16,16], index: 4, kind: input, shape index: {}]
  %s5 = inlined_call_operand.vmem [shape: f32[16,16], index: 5, kind: input, shape index: {}]
  %s6 = inlined_call_operand.vmem [shape: f32[24,24], index: 6, kind: input, shape index: {}]
  %s7 = inlined_call_operand.vmem [shape: f32[24,24], index: 7, kind: input, shape index: {}]
  %s8 = inlined_call_operand.vmem [shape: f32[16,24], index: 8, kind: input, shape index: {}]
  %s9 = inlined_call_operand.vmem [shape: f32[16,24], index: 9, kind: input, shape index: {}]
  %s10 = inlined_call_operand.vmem [shape: f32[24,16], index: 10, kind: input, shape index: {}]
  %s11 = inlined_call_operand.vmem [shape: f32[24,16], index: 11, kind: input, shape index: {}]
  %s12 = inlined_call_operand.vmem [shape: f32[6,16], index: 12, kind: input, shape index: {}]
  %s13 = inlined_call_operand.vmem [shape: f32[1,16], index: 13, kind: input, shape index: {}]
  %s14 = inlined_call_operand.vmem [shape: f32[36,16], index: 14, kind: input, shape index: {}]
  %s15 = inlined_call_operand.vmem [shape: f32[1,16], index: 15, kind: input, shape index: {}]
  %s16 = inlined_call_operand.vmem [shape: f32[1,16], index: 16, kind: input, shape index: {}]
  %s17 = inlined_call_operand.vmem [shape: f32[1,16], index: 17, kind: input, shape index: {}]
  %s18 = inlined_call_operand.vmem [shape: f32[1,16], index: 18, kind: input, shape index: {}]
  %s19 = inlined_call_operand.vmem [shape: f32[1,16], index: 19, kind: input, shape index: {}]
  %s20 = inlined_call_operand.vmem [shape: f32[16,16], index: 20, kind: output, shape index: {0}]
  %s21 = inlined_call_operand.vmem [shape: f32[24,16], index: 21, kind: output, shape index: {1}]
  %22 = xla_tuple %s20, %s21
  %s23 = sld [smem:[#allocation0]]
  $region98: #{gnn_forward.2} parent=0
    _
  %s25 = ssub.s32 1, %s23
  %s26 = scalar_select 0, %s25, %s23
  // Predicated region
  $region2: #{gnn_forward.2} parent=0 // pred_check
    _
  $region3: #{gnn_forward.2} parent=0 // pred_check_branch
    %28 = sbr.rel (0) target = $region5
  $region4: #{gnn_forward.2} parent=0 // pred_region
    _
  $region5: #{gnn_forward.2} parent=0 // pred_fallthru
    _
  // Predicated region
  $region6: #{gnn_forward.2} parent=0 // pred_check
    _
  $region7: #{gnn_forward.2} parent=0 // pred_check_branch
    %30 = sbr.rel (0) target = $region9
  $region8: #{gnn_forward.2} parent=0 // pred_region
    _
  $region9: #{gnn_forward.2} parent=0 // pred_fallthru
    _
  // Predicated region
  $region10: #{gnn_forward.2} parent=0 // pred_check
    _
  $region11: #{gnn_forward.2} parent=0 // pred_check_branch
    %32 = sbr.rel (0) target = $region13
  $region12: #{gnn_forward.2} parent=0 // pred_region
    _
  $region13: #{gnn_forward.2} parent=0 // pred_fallthru
    _
  // Predicated region
  $region14: #{gnn_forward.2} parent=0 // pred_check
    _
  $region15: #{gnn_forward.2} parent=0 // pred_check_branch
    %34 = sbr.rel (0) target = $region17
  $region16: #{gnn_forward.2} parent=0 // pred_region
    _
  $region17: #{gnn_forward.2} parent=0 // pred_fallthru
    _
  // Predicated region
  $region18: #{gnn_forward.2} parent=0 // pred_check
    _
  $region19: #{gnn_forward.2} parent=0 // pred_check_branch
    %36 = sbr.rel (0) target = $region21
  $region20: #{gnn_forward.2} parent=0 // pred_region
    _
  $region21: #{gnn_forward.2} parent=0 // pred_fallthru
    _
  // Predicated region
  $region22: #{gnn_forward.2} parent=0 // pred_check
    _
  $region23: #{gnn_forward.2} parent=0 // pred_check_branch
    %38 = sbr.rel (0) target = $region25
  $region24: #{gnn_forward.2} parent=0 // pred_region
    _
  $region25: #{gnn_forward.2} parent=0 // pred_fallthru
    _
  // Predicated region
  $region26: #{gnn_forward.2} parent=0 // pred_check
    _
  $region27: #{gnn_forward.2} parent=0 // pred_check_branch
    %40 = sbr.rel (0) target = $region29
  $region28: #{gnn_forward.2} parent=0 // pred_region
    _
  $region29: #{gnn_forward.2} parent=0 // pred_fallthru
    _
  // Predicated region
  $region30: #{gnn_forward.2} parent=0 // pred_check
    _
  $region31: #{gnn_forward.2} parent=0 // pred_check_branch
    %42 = sbr.rel (0) target = $region33
  $region32: #{gnn_forward.2} parent=0 // pred_region
    _
  $region33: #{gnn_forward.2} parent=0 // pred_fallthru
    _
  // Predicated region
  $region34: #{gnn_forward.2} parent=0 // pred_check
    _
  $region35: #{gnn_forward.2} parent=0 // pred_check_branch
    %44 = sbr.rel (0) target = $region37
  $region36: #{gnn_forward.2} parent=0 // pred_region
    _
  $region37: #{gnn_forward.2} parent=0 // pred_fallthru
    _
  // Predicated region
  $region38: #{gnn_forward.2} parent=0 // pred_check
    _
  $region39: #{gnn_forward.2} parent=0 // pred_check_branch
    %46 = sbr.rel (0) target = $region41
  $region40: #{gnn_forward.2} parent=0 // pred_region
    _
  $region41: #{gnn_forward.2} parent=0 // pred_fallthru
    _
  // Predicated region
  $region42: #{gnn_forward.2} parent=0 // pred_check
    _
  $region43: #{gnn_forward.2} parent=0 // pred_check_branch
    %48 = sbr.rel (0) target = $region45
  $region44: #{gnn_forward.2} parent=0 // pred_region
    _
  $region45: #{gnn_forward.2} parent=0 // pred_fallthru
    _
  // Predicated region
  $region46: #{gnn_forward.2} parent=0 // pred_check
    _
  $region47: #{gnn_forward.2} parent=0 // pred_check_branch
    %50 = sbr.rel (0) target = $region49
  $region48: #{gnn_forward.2} parent=0 // pred_region
    _
  $region49: #{gnn_forward.2} parent=0 // pred_fallthru
    _
  // Predicated region
  $region50: #{gnn_forward.2} parent=0 // pred_check
    _
  $region51: #{gnn_forward.2} parent=0 // pred_check_branch
    %52 = sbr.rel (0) target = $region53
  $region52: #{gnn_forward.2} parent=0 // pred_region
    _
  $region53: #{gnn_forward.2} parent=0 // pred_fallthru
    _
  // Predicated region
  $region54: #{gnn_forward.2} parent=0 // pred_check
    _
  $region55: #{gnn_forward.2} parent=0 // pred_check_branch
    %54 = sbr.rel (0) target = $region57
  $region56: #{gnn_forward.2} parent=0 // pred_region
    _
  $region57: #{gnn_forward.2} parent=0 // pred_fallthru
    _
  // Predicated region
  $region58: #{gnn_forward.2} parent=0 // pred_check
    _
  $region59: #{gnn_forward.2} parent=0 // pred_check_branch
    %56 = sbr.rel (0) target = $region61
  $region60: #{gnn_forward.2} parent=0 // pred_region
    _
  $region61: #{gnn_forward.2} parent=0 // pred_fallthru
    _
  // Predicated region
  $region62: #{gnn_forward.2} parent=0 // pred_check
    _
  $region63: #{gnn_forward.2} parent=0 // pred_check_branch
    %58 = sbr.rel (0) target = $region65
  $region64: #{gnn_forward.2} parent=0 // pred_region
    _
  $region65: #{gnn_forward.2} parent=0 // pred_fallthru
    _
  // Predicated region
  $region66: #{gnn_forward.2} parent=0 // pred_check
    _
  $region67: #{gnn_forward.2} parent=0 // pred_check_branch
    %60 = sbr.rel (0) target = $region69
  $region68: #{gnn_forward.2} parent=0 // pred_region
    _
  $region69: #{gnn_forward.2} parent=0 // pred_fallthru
    _
  // Predicated region
  $region70: #{gnn_forward.2} parent=0 // pred_check
    _
  $region71: #{gnn_forward.2} parent=0 // pred_check_branch
    %62 = sbr.rel (0) target = $region73
  $region72: #{gnn_forward.2} parent=0 // pred_region
    _
  $region73: #{gnn_forward.2} parent=0 // pred_fallthru
    _
  // Predicated region
  $region74: #{gnn_forward.2} parent=0 // pred_check
    _
  $region75: #{gnn_forward.2} parent=0 // pred_check_branch
    %64 = sbr.rel (0) target = $region77
  $region76: #{gnn_forward.2} parent=0 // pred_region
    _
  $region77: #{gnn_forward.2} parent=0 // pred_fallthru
    _
  // Predicated region
  $region78: #{gnn_forward.2} parent=0 // pred_check
    _
  $region79: #{gnn_forward.2} parent=0 // pred_check_branch
    %66 = sbr.rel (0) target = $region81
  $region80: #{gnn_forward.2} parent=0 // pred_region
    _
  $region81: #{gnn_forward.2} parent=0 // pred_fallthru
    _
  %v67 = vld [vmem:[%s0] sm:$0xff]
  %v68 = vld [vmem:[%s0 + $0x8] sm:$0xff]
  %v69 = vld [vmem:[%s1] sm:$0xff]
  %v70 = vld [vmem:[%s1 + $0x8] sm:$0xff]
  %v71 = vld [vmem:[%s1 + $0x10] sm:$0xff]
  %v72 = vld [vmem:[%s8] sm:$0xff]
  %v73 = vld [vmem:[%s8 + $0x8] sm:$0xff]
  %vm74 = vcmask 195584
  %v76 = vsel %vm74, %v72, 0
  %v79 = vsel %vm74, %v73, 0
  %81 = vmatprep.subr.mxu0 0.0
  %82 = vmatpush1.msra.mxu0 %v69
  %83 = vmatprep.subr.mxu0 0.0
  %84 = vmatpush1.msra.mxu0 %v70
  %85 = vmatprep.subr.mxu0 0.0
  %86 = vmatpush1.msra.mxu0 %v71
  %87 = vmatprep.subr.mxu0 0.0
  %88 = vmatpush1.msra.mxu0 0.0
  %89 = vmatprep.subr.mxu0 0.0
  %90 = vmatpush1.msra.mxu0 0.0
  %91 = vmatprep.subr.mxu0 0.0
  %92 = vmatpush1.msra.mxu0 0.0
  %93 = vmatprep.subr.mxu0 0.0
  %94 = vmatpush1.msra.mxu0 0.0
  %95 = vmatprep.subr.mxu0 0.0
  %96 = vmatpush1.msra.mxu0 0.0
  %97 = vmatprep.subr.mxu0 0.0
  %98 = vmatpush1.msra.mxu0 0.0
  %99 = vmatprep.subr.mxu0 0.0
  %100 = vmatpush1.msra.mxu0 0.0
  %101 = vmatprep.subr.mxu0 0.0
  %102 = vmatpush1.msra.mxu0 0.0
  %103 = vmatprep.subr.mxu0 0.0
  %104 = vmatpush1.msra.mxu0 0.0
  %105 = vmatprep.subr.mxu0 0.0
  %106 = vmatpush1.msra.mxu0 0.0
  %107 = vmatprep.subr.mxu0 0.0
  %108 = vmatpush1.msra.mxu0 0.0
  %109 = vmatprep.subr.mxu0 0.0
  %110 = vmatpush1.msra.mxu0 0.0
  %111 = vmatprep.subr.mxu0 0.0
  %112 = vmatpush1.msra.mxu0 0.0
  %113 = vmatprep.subr.mxu0 0.0
  %114 = vmatpush1.msra.mxu0 0.0
  %115 = vmatprep.subr.mxu0 0.0
  %116 = vmatpush1.msra.mxu0 0.0
  %117 = vmatprep.subr.mxu0 0.0
  %118 = vmatpush1.msra.mxu0 0.0
  %119 = vmatprep.subr.mxu0 0.0
  %120 = vmatpush1.msra.mxu0 0.0
  %121 = vmatprep.subr.mxu0 0.0
  %122 = vmatpush1.msra.mxu0 0.0
  %123 = vmatprep.subr.mxu0 0.0
  %124 = vmatpush1.msra.mxu0 0.0
  %125 = vmatprep.subr.mxu0 0.0
  %126 = vmatpush1.msra.mxu0 0.0
  %127 = vmatprep.subr.mxu0 0.0
  %128 = vmatpush1.msra.mxu0 0.0
  %129 = vmatprep.subr.mxu0 0.0
  %130 = vmatpush1.msra.mxu0 0.0
  %131 = vmatprep.subr.mxu0 0.0
  %132 = vmatpush1.msra.mxu0 0.0
  %133 = vmatprep.subr.mxu0 0.0
  %134 = vmatpush1.msra.mxu0 0.0
  %135 = vmatprep.subr.mxu0 0.0
  %136 = vmatpush1.msra.mxu0 0.0
  %137 = vmatprep.subr.mxu0 0.0
  %138 = vmatpush1.msra.mxu0 0.0
  %139 = vmatprep.subr.mxu0 0.0
  %140 = vmatpush1.msra.mxu0 0.0
  %141 = vmatprep.subr.mxu0 0.0
  %142 = vmatpush1.msra.mxu0 0.0
  %143 = vmatprep.subr.mxu0 0.0
  %144 = vmatpush1.msra.mxu0 0.0
  %145 = vmatprep.mubr.f32.mxu0 0.0
  %146 = vmatmul.mubr.f32.gmra.mrb[0].mxu0 %v76
  %v147 = vpop.f32.mrb[0].mxu0
  %v148 = vadd.f32 0.0, %v147
  %v149 = vpop.f32.mrb[0].mxu0
  %150 = vmatprep.mubr.f32.mxu0 0.0
  %151 = vmatmul.mubr.f32.gmra.mrb[0].mxu0 %v79
  %v152 = vpop.f32.mrb[0].mxu0
  %v153 = vadd.f32 0.0, %v152
  %v154 = vpop.f32.mrb[0].mxu0
  %155 = vdwg.mxu0
  %v156 = vld [vmem:[%s9] sm:$0xff]
  %v157 = vld [vmem:[%s9 + $0x8] sm:$0xff]
  %v159 = vsel %vm74, %v156, 0
  %v162 = vsel %vm74, %v157, 0
  %164 = vmatprep.subr.mxu0 0.0
  %165 = vmatpush1.msra.mxu0 %v69
  %166 = vmatprep.subr.mxu0 0.0
  %167 = vmatpush1.msra.mxu0 %v70
  %168 = vmatprep.subr.mxu0 0.0
  %169 = vmatpush1.msra.mxu0 %v71
  %170 = vmatprep.subr.mxu0 0.0
  %171 = vmatpush1.msra.mxu0 0.0
  %172 = vmatprep.subr.mxu0 0.0
  %173 = vmatpush1.msra.mxu0 0.0
  %174 = vmatprep.subr.mxu0 0.0
  %175 = vmatpush1.msra.mxu0 0.0
  %176 = vmatprep.subr.mxu0 0.0
  %177 = vmatpush1.msra.mxu0 0.0
  %178 = vmatprep.subr.mxu0 0.0
  %179 = vmatpush1.msra.mxu0 0.0
  %180 = vmatprep.subr.mxu0 0.0
  %181 = vmatpush1.msra.mxu0 0.0
  %182 = vmatprep.subr.mxu0 0.0
  %183 = vmatpush1.msra.mxu0 0.0
  %184 = vmatprep.subr.mxu0 0.0
  %185 = vmatpush1.msra.mxu0 0.0
  %186 = vmatprep.subr.mxu0 0.0
  %187 = vmatpush1.msra.mxu0 0.0
  %188 = vmatprep.subr.mxu0 0.0
  %189 = vmatpush1.msra.mxu0 0.0
  %190 = vmatprep.subr.mxu0 0.0
  %191 = vmatpush1.msra.mxu0 0.0
  %192 = vmatprep.subr.mxu0 0.0
  %193 = vmatpush1.msra.mxu0 0.0
  %194 = vmatprep.subr.mxu0 0.0
  %195 = vmatpush1.msra.mxu0 0.0
  %196 = vmatprep.subr.mxu0 0.0
  %197 = vmatpush1.msra.mxu0 0.0
  %198 = vmatprep.subr.mxu0 0.0
  %199 = vmatpush1.msra.mxu0 0.0
  %200 = vmatprep.subr.mxu0 0.0
  %201 = vmatpush1.msra.mxu0 0.0
  %202 = vmatprep.subr.mxu0 0.0
  %203 = vmatpush1.msra.mxu0 0.0
  %204 = vmatprep.subr.mxu0 0.0
  %205 = vmatpush1.msra.mxu0 0.0
  %206 = vmatprep.subr.mxu0 0.0
  %207 = vmatpush1.msra.mxu0 0.0
  %208 = vmatprep.subr.mxu0 0.0
  %209 = vmatpush1.msra.mxu0 0.0
  %210 = vmatprep.subr.mxu0 0.0
  %211 = vmatpush1.msra.mxu0 0.0
  %212 = vmatprep.subr.mxu0 0.0
  %213 = vmatpush1.msra.mxu0 0.0
  %214 = vmatprep.subr.mxu0 0.0
  %215 = vmatpush1.msra.mxu0 0.0
  %216 = vmatprep.subr.mxu0 0.0
  %217 = vmatpush1.msra.mxu0 0.0
  %218 = vmatprep.subr.mxu0 0.0
  %219 = vmatpush1.msra.mxu0 0.0
  %220 = vmatprep.subr.mxu0 0.0
  %221 = vmatpush1.msra.mxu0 0.0
  %222 = vmatprep.subr.mxu0 0.0
  %223 = vmatpush1.msra.mxu0 0.0
  %224 = vmatprep.subr.mxu0 0.0
  %225 = vmatpush1.msra.mxu0 0.0
  %226 = vmatprep.subr.mxu0 0.0
  %227 = vmatpush1.msra.mxu0 0.0
  %228 = vmatprep.mubr.f32.mxu0 0.0
  %229 = vmatmul.mubr.f32.gmra.mrb[0].mxu0 %v159
  %v230 = vpop.f32.mrb[0].mxu0
  %v231 = vadd.f32 0.0, %v230
  %v232 = vpop.f32.mrb[0].mxu0
  %233 = vmatprep.mubr.f32.mxu0 0.0
  %234 = vmatmul.mubr.f32.gmra.mrb[0].mxu0 %v162
  %v235 = vpop.f32.mrb[0].mxu0
  %v236 = vadd.f32 0.0, %v235
  %v237 = vpop.f32.mrb[0].mxu0
  %238 = vdwg.mxu0
  %v239 = vld [vmem:[%s4] sm:$0xff]
  %v240 = vld [vmem:[%s4 + $0x8] sm:$0xff]
  %vm241 = vcmask 130048
  %v243 = vsel %vm241, %v239, 0
  %v246 = vsel %vm241, %v240, 0
  %248 = vmatprep.subr.mxu0 0.0
  %249 = vmatpush1.msra.mxu0 %v67
  %250 = vmatprep.subr.mxu0 0.0
  %251 = vmatpush1.msra.mxu0 %v68
  %252 = vmatprep.subr.mxu0 0.0
  %253 = vmatpush1.msra.mxu0 0.0
  %254 = vmatprep.subr.mxu0 0.0
  %255 = vmatpush1.msra.mxu0 0.0
  %256 = vmatprep.subr.mxu0 0.0
  %257 = vmatpush1.msra.mxu0 0.0
  %258 = vmatprep.subr.mxu0 0.0
  %259 = vmatpush1.msra.mxu0 0.0
  %260 = vmatprep.subr.mxu0 0.0
  %261 = vmatpush1.msra.mxu0 0.0
  %262 = vmatprep.subr.mxu0 0.0
  %263 = vmatpush1.msra.mxu0 0.0
  %264 = vmatprep.subr.mxu0 0.0
  %265 = vmatpush1.msra.mxu0 0.0
  %266 = vmatprep.subr.mxu0 0.0
  %267 = vmatpush1.msra.mxu0 0.0
  %268 = vmatprep.subr.mxu0 0.0
  %269 = vmatpush1.msra.mxu0 0.0
  %270 = vmatprep.subr.mxu0 0.0
  %271 = vmatpush1.msra.mxu0 0.0
  %272 = vmatprep.subr.mxu0 0.0
  %273 = vmatpush1.msra.mxu0 0.0
  %274 = vmatprep.subr.mxu0 0.0
  %275 = vmatpush1.msra.mxu0 0.0
  %276 = vmatprep.subr.mxu0 0.0
  %277 = vmatpush1.msra.mxu0 0.0
  %278 = vmatprep.subr.mxu0 0.0
  %279 = vmatpush1.msra.mxu0 0.0
  %280 = vmatprep.subr.mxu0 0.0
  %281 = vmatpush1.msra.mxu0 0.0
  %282 = vmatprep.subr.mxu0 0.0
  %283 = vmatpush1.msra.mxu0 0.0
  %284 = vmatprep.subr.mxu0 0.0
  %285 = vmatpush1.msra.mxu0 0.0
  %286 = vmatprep.subr.mxu0 0.0
  %287 = vmatpush1.msra.mxu0 0.0
  %288 = vmatprep.subr.mxu0 0.0
  %289 = vmatpush1.msra.mxu0 0.0
  %290 = vmatprep.subr.mxu0 0.0
  %291 = vmatpush1.msra.mxu0 0.0
  %292 = vmatprep.subr.mxu0 0.0
  %293 = vmatpush1.msra.mxu0 0.0
  %294 = vmatprep.subr.mxu0 0.0
  %295 = vmatpush1.msra.mxu0 0.0
  %296 = vmatprep.subr.mxu0 0.0
  %297 = vmatpush1.msra.mxu0 0.0
  %298 = vmatprep.subr.mxu0 0.0
  %299 = vmatpush1.msra.mxu0 0.0
  %300 = vmatprep.subr.mxu0 0.0
  %301 = vmatpush1.msra.mxu0 0.0
  %302 = vmatprep.subr.mxu0 0.0
  %303 = vmatpush1.msra.mxu0 0.0
  %304 = vmatprep.subr.mxu0 0.0
  %305 = vmatpush1.msra.mxu0 0.0
  %306 = vmatprep.subr.mxu0 0.0
  %307 = vmatpush1.msra.mxu0 0.0
  %308 = vmatprep.subr.mxu0 0.0
  %309 = vmatpush1.msra.mxu0 0.0
  %310 = vmatprep.subr.mxu0 0.0
  %311 = vmatpush1.msra.mxu0 0.0
  %312 = vmatprep.mubr.f32.mxu0 0.0
  %313 = vmatmul.mubr.f32.gmra.mrb[0].mxu0 %v243
  %v314 = vpop.f32.mrb[0].mxu0
  %v315 = vadd.f32 0.0, %v314
  %v316 = vpop.f32.mrb[0].mxu0
  %317 = vmatprep.mubr.f32.mxu0 0.0
  %318 = vmatmul.mubr.f32.gmra.mrb[0].mxu0 %v246
  %v319 = vpop.f32.mrb[0].mxu0
  %v320 = vadd.f32 0.0, %v319
  %v321 = vpop.f32.mrb[0].mxu0
  %322 = vdwg.mxu0
  %v323 = vld [vmem:[%s5] sm:$0xff]
  %v324 = vld [vmem:[%s5 + $0x8] sm:$0xff]
  %v326 = vsel %vm241, %v323, 0
  %v329 = vsel %vm241, %v324, 0
  %331 = vmatprep.subr.mxu0 0.0
  %332 = vmatpush1.msra.mxu0 %v67
  %333 = vmatprep.subr.mxu0 0.0
  %334 = vmatpush1.msra.mxu0 %v68
  %335 = vmatprep.subr.mxu0 0.0
  %336 = vmatpush1.msra.mxu0 0.0
  %337 = vmatprep.subr.mxu0 0.0
  %338 = vmatpush1.msra.mxu0 0.0
  %339 = vmatprep.subr.mxu0 0.0
  %340 = vmatpush1.msra.mxu0 0.0
  %341 = vmatprep.subr.mxu0 0.0
  %342 = vmatpush1.msra.mxu0 0.0
  %343 = vmatprep.subr.mxu0 0.0
  %344 = vmatpush1.msra.mxu0 0.0
  %345 = vmatprep.subr.mxu0 0.0
  %346 = vmatpush1.msra.mxu0 0.0
  %347 = vmatprep.subr.mxu0 0.0
  %348 = vmatpush1.msra.mxu0 0.0
  %349 = vmatprep.subr.mxu0 0.0
  %350 = vmatpush1.msra.mxu0 0.0
  %351 = vmatprep.subr.mxu0 0.0
  %352 = vmatpush1.msra.mxu0 0.0
  %353 = vmatprep.subr.mxu0 0.0
  %354 = vmatpush1.msra.mxu0 0.0
  %355 = vmatprep.subr.mxu0 0.0
  %356 = vmatpush1.msra.mxu0 0.0
  %357 = vmatprep.subr.mxu0 0.0
  %358 = vmatpush1.msra.mxu0 0.0
  %359 = vmatprep.subr.mxu0 0.0
  %360 = vmatpush1.msra.mxu0 0.0
  %361 = vmatprep.subr.mxu0 0.0
  %362 = vmatpush1.msra.mxu0 0.0
  %363 = vmatprep.subr.mxu0 0.0
  %364 = vmatpush1.msra.mxu0 0.0
  %365 = vmatprep.subr.mxu0 0.0
  %366 = vmatpush1.msra.mxu0 0.0
  %367 = vmatprep.subr.mxu0 0.0
  %368 = vmatpush1.msra.mxu0 0.0
  %369 = vmatprep.subr.mxu0 0.0
  %370 = vmatpush1.msra.mxu0 0.0
  %371 = vmatprep.subr.mxu0 0.0
  %372 = vmatpush1.msra.mxu0 0.0
  %373 = vmatprep.subr.mxu0 0.0
  %374 = vmatpush1.msra.mxu0 0.0
  %375 = vmatprep.subr.mxu0 0.0
  %376 = vmatpush1.msra.mxu0 0.0
  %377 = vmatprep.subr.mxu0 0.0
  %378 = vmatpush1.msra.mxu0 0.0
  %379 = vmatprep.subr.mxu0 0.0
  %380 = vmatpush1.msra.mxu0 0.0
  %381 = vmatprep.subr.mxu0 0.0
  %382 = vmatpush1.msra.mxu0 0.0
  %383 = vmatprep.subr.mxu0 0.0
  %384 = vmatpush1.msra.mxu0 0.0
  %385 = vmatprep.subr.mxu0 0.0
  %386 = vmatpush1.msra.mxu0 0.0
  %387 = vmatprep.subr.mxu0 0.0
  %388 = vmatpush1.msra.mxu0 0.0
  %389 = vmatprep.subr.mxu0 0.0
  %390 = vmatpush1.msra.mxu0 0.0
  %391 = vmatprep.subr.mxu0 0.0
  %392 = vmatpush1.msra.mxu0 0.0
  %393 = vmatprep.subr.mxu0 0.0
  %394 = vmatpush1.msra.mxu0 0.0
  %395 = vmatprep.mubr.f32.mxu0 0.0
  %396 = vmatmul.mubr.f32.gmra.mrb[0].mxu0 %v326
  %v397 = vpop.f32.mrb[0].mxu0
  %v398 = vadd.f32 0.0, %v397
  %v399 = vpop.f32.mrb[0].mxu0
  %400 = vmatprep.mubr.f32.mxu0 0.0
  %401 = vmatmul.mubr.f32.gmra.mrb[0].mxu0 %v329
  %v402 = vpop.f32.mrb[0].mxu0
  %v403 = vadd.f32 0.0, %v402
  %v404 = vpop.f32.mrb[0].mxu0
  %405 = vdwg.mxu0
  %v406 = vld [vmem:[%s2] sm:$0xff]
  %v407 = vld [vmem:[%s2 + $0x8] sm:$0xff]
  %v408 = vmul.f32 %v406, %v67
  %v409 = vmul.f32 %v407, %v68
  %vm410 = vcmask 7168
  %411 = vst.msk [vmem:[#allocation2] sm:$0xff] %vm410, %v67
  %412 = vst.msk [vmem:[#allocation2 + $0x8] sm:$0xff] %vm410, %v68
  %415 = vrot.lane.b32.xlu0 %v408, 1
  %v416 = vpop.permute.xlu0 %415
  %417 = vrot.lane.b32.xlu0 %v409, 1
  %v418 = vpop.permute.xlu0 %417
  %vm421 = vcmask 15368
  %422 = vst.msk [vmem:[#allocation2] sm:$0xff] %vm421, %v416
  %423 = vst.msk [vmem:[#allocation2 + $0x8] sm:$0xff] %vm421, %v418
  %426 = vrot.lane.b32.xlu0 %v315, 2
  %v427 = vpop.permute.xlu0 %426
  %428 = vrot.lane.b32.xlu0 %v320, 2
  %v429 = vpop.permute.xlu0 %428
  %vm432 = vcmask 23568
  %433 = vst.msk [vmem:[#allocation2] sm:$0xff] %vm432, %v427
  %434 = vst.msk [vmem:[#allocation2 + $0x8] sm:$0xff] %vm432, %v429
  %437 = vrot.lane.b32.xlu0 %v398, 3
  %v438 = vpop.permute.xlu0 %437
  %439 = vrot.lane.b32.xlu0 %v403, 3
  %v440 = vpop.permute.xlu0 %439
  %vm443 = vcmask 31768
  %444 = vst.msk [vmem:[#allocation2] sm:$0xff] %vm443, %v438
  %445 = vst.msk [vmem:[#allocation2 + $0x8] sm:$0xff] %vm443, %v440
  %448 = vrot.lane.b32.xlu0 %v148, 4
  %v449 = vpop.permute.xlu0 %448
  %450 = vrot.lane.b32.xlu0 %v153, 4
  %v451 = vpop.permute.xlu0 %450
  %vm454 = vcmask 39968
  %455 = vst.msk [vmem:[#allocation2] sm:$0xff] %vm454, %v449
  %456 = vst.msk [vmem:[#allocation2 + $0x8] sm:$0xff] %vm454, %v451
  %459 = vrot.lane.b32.xlu0 %v231, 5
  %v460 = vpop.permute.xlu0 %459
  %461 = vrot.lane.b32.xlu0 %v236, 5
  %v462 = vpop.permute.xlu0 %461
  %vm465 = vcmask 48168
  %466 = vst.msk [vmem:[#allocation2] sm:$0xff] %vm465, %v460
  %467 = vst.msk [vmem:[#allocation2 + $0x8] sm:$0xff] %vm465, %v462
  %v468 = vld [vmem:[#allocation2] sm:$0xff]
  %v469 = vld [vmem:[#allocation2 + $0x8] sm:$0xff]
  %v470 = vld [vmem:[%s12] sm:$0x3f]
  %v471 = vld [vmem:[%s13] sm:$0x1]
  %v473 = vlaneseq
  %v474 = vshrl.u32 %v473, 7
  %v475 = vsub.s32 0, %v474
  %v476 = vrot.slane %v471, %v475
  %vm478 = vcmask 48128
  %v480 = vsel %vm478, %v468, 0
  %v483 = vsel %vm478, %v469, 0
  %vm485 = vcmask 1045504
  %v487 = vsel %vm485, %v470, 0
  %489 = vmatprep.subr.mxu0 0.0
  %490 = vmatpush1.msra.mxu0 %v487
  %491 = vmatprep.subr.mxu0 0.0
  %492 = vmatpush1.msra.mxu0 0.0
  %493 = vmatprep.subr.mxu0 0.0
  %494 = vmatpush1.msra.mxu0 0.0
  %495 = vmatprep.subr.mxu0 0.0
  %496 = vmatpush1.msra.mxu0 0.0
  %497 = vmatprep.subr.mxu0 0.0
  %498 = vmatpush1.msra.mxu0 0.0
  %499 = vmatprep.subr.mxu0 0.0
  %500 = vmatpush1.msra.mxu0 0.0
  %501 = vmatprep.subr.mxu0 0.0
  %502 = vmatpush1.msra.mxu0 0.0
  %503 = vmatprep.subr.mxu0 0.0
  %504 = vmatpush1.msra.mxu0 0.0
  %505 = vmatprep.subr.mxu0 0.0
  %506 = vmatpush1.msra.mxu0 0.0
  %507 = vmatprep.subr.mxu0 0.0
  %508 = vmatpush1.msra.mxu0 0.0
  %509 = vmatprep.subr.mxu0 0.0
  %510 = vmatpush1.msra.mxu0 0.0
  %511 = vmatprep.subr.mxu0 0.0
  %512 = vmatpush1.msra.mxu0 0.0
  %513 = vmatprep.subr.mxu0 0.0
  %514 = vmatpush1.msra.mxu0 0.0
  %515 = vmatprep.subr.mxu0 0.0
  %516 = vmatpush1.msra.mxu0 0.0
  %517 = vmatprep.subr.mxu0 0.0
  %518 = vmatpush1.msra.mxu0 0.0
  %519 = vmatprep.subr.mxu0 0.0
  %520 = vmatpush1.msra.mxu0 0.0
  %521 = vmatprep.subr.mxu0 0.0
  %522 = vmatpush1.msra.mxu0 0.0
  %523 = vmatprep.subr.mxu0 0.0
  %524 = vmatpush1.msra.mxu0 0.0
  %525 = vmatprep.subr.mxu0 0.0
  %526 = vmatpush1.msra.mxu0 0.0
  %527 = vmatprep.subr.mxu0 0.0
  %528 = vmatpush1.msra.mxu0 0.0
  %529 = vmatprep.subr.mxu0 0.0
  %530 = vmatpush1.msra.mxu0 0.0
  %531 = vmatprep.subr.mxu0 0.0
  %532 = vmatpush1.msra.mxu0 0.0
  %533 = vmatprep.subr.mxu0 0.0
  %534 = vmatpush1.msra.mxu0 0.0
  %535 = vmatprep.subr.mxu0 0.0
  %536 = vmatpush1.msra.mxu0 0.0
  %537 = vmatprep.subr.mxu0 0.0
  %538 = vmatpush1.msra.mxu0 0.0
  %539 = vmatprep.subr.mxu0 0.0
  %540 = vmatpush1.msra.mxu0 0.0
  %541 = vmatprep.subr.mxu0 0.0
  %542 = vmatpush1.msra.mxu0 0.0
  %543 = vmatprep.subr.mxu0 0.0
  %544 = vmatpush1.msra.mxu0 0.0
  %545 = vmatprep.subr.mxu0 0.0
  %546 = vmatpush1.msra.mxu0 0.0
  %547 = vmatprep.subr.mxu0 0.0
  %548 = vmatpush1.msra.mxu0 0.0
  %549 = vmatprep.subr.mxu0 0.0
  %550 = vmatpush1.msra.mxu0 0.0
  %551 = vmatprep.subr.mxu0 0.0
  %552 = vmatpush1.msra.mxu0 0.0
  %553 = vmatprep.mubr.f32.mxu0 0.0
  %554 = vmatmul.mubr.f32.gmra.mrb[0].mxu0 %v480
  %v555 = vpop.f32.mrb[0].mxu0
  %v556 = vadd.f32 %v476, %v555
  %v557 = vpop.f32.mrb[0].mxu0
  %558 = vmatprep.mubr.f32.mxu0 0.0
  %559 = vmatmul.mubr.f32.gmra.mrb[0].mxu0 %v483
  %v560 = vpop.f32.mrb[0].mxu0
  %v561 = vadd.f32 %v476, %v560
  %v562 = vpop.f32.mrb[0].mxu0
  %563 = vdwg.mxu0
  %v564 = vld [vmem:[%s16] sm:$0x1]
  %v565 = vld [vmem:[%s17] sm:$0x1]
  %v566 = vlaneseq
  %v567 = vand.u32 %v566, 127
  %vm568 = vcmp.ge.s32.totalorder %v567, 8
  %v569 = vmax.f32 %v556, 0.0
  %v570 = vmax.f32 %v561, 0.0
  %v571 = vsel %vm568, %v569, %v556
  %v572 = vsel %vm568, %v570, %v561
  %v573 = vsel %vm241, %v571, 0.0
  %v574 = vsel %vm241, %v572, 0.0
  %v575 = vadd.f32 %v573, %v574
  %v576 = vrot.slane %v575, 4
  %v577 = vadd.f32 %v575, %v576
  %v578 = vrot.slane %v577, 2
  %v579 = vadd.f32 %v577, %v578
  %v580 = vrot.slane %v579, 1
  %v581 = vadd.f32 %v579, %v580
  %v582 = vrcp.pop 16.0
  %v583 = vmul.f32 %v581, %v582
  %v584 = vsub.f32 %v571, %v583
  %v585 = vsub.f32 %v572, %v583
  %v586 = vmul.f32 %v584, %v584
  %v587 = vmul.f32 %v585, %v585
  %v588 = vsel %vm241, %v586, 0.0
  %v589 = vsel %vm241, %v587, 0.0
  %v590 = vadd.f32 %v588, %v589
  %v591 = vrot.slane %v590, 4
  %v592 = vadd.f32 %v590, %v591
  %v593 = vrot.slane %v592, 2
  %v594 = vadd.f32 %v592, %v593
  %v595 = vrot.slane %v594, 1
  %v596 = vadd.f32 %v594, %v595
  %v597 = vmul.f32 %v596, %v582
  %v598 = vadd.f32 %v597, 1e-05
  %v599 = vrsqrt.pop %v598
  %v600 = vmul.f32 %v584, %v599
  %v601 = vmul.f32 %v585, %v599
  %v603 = vlaneseq
  %v604 = vshrl.u32 %v603, 7
  %v605 = vsub.s32 0, %v604
  %v606 = vrot.slane %v564, %v605
  %v608 = vmul.f32 %v600, %v606
  %v609 = vmul.f32 %v601, %v606
  %v611 = vlaneseq
  %v612 = vshrl.u32 %v611, 7
  %v613 = vsub.s32 0, %v612
  %v614 = vrot.slane %v565, %v613
  %v616 = vadd.f32 %v608, %v614
  %v617 = vadd.f32 %v609, %v614
  %618 = vst.msk [vmem:[%s20] sm:$0xff] %vm241, %v616
  %619 = vst.msk [vmem:[%s20 + $0x8] sm:$0xff] %vm241, %v617
  %v620 = vld [vmem:[%s6] sm:$0xff]
  %v621 = vld [vmem:[%s6 + $0x8] sm:$0xff]
  %v622 = vld [vmem:[%s6 + $0x10] sm:$0xff]
  %v624 = vsel %vm74, %v620, 0
  %v627 = vsel %vm74, %v621, 0
  %v630 = vsel %vm74, %v622, 0
  %632 = vmatprep.subr.mxu0 0.0
  %633 = vmatpush1.msra.mxu0 %v69
  %634 = vmatprep.subr.mxu0 0.0
  %635 = vmatpush1.msra.mxu0 %v70
  %636 = vmatprep.subr.mxu0 0.0
  %637 = vmatpush1.msra.mxu0 %v71
  %638 = vmatprep.subr.mxu0 0.0
  %639 = vmatpush1.msra.mxu0 0.0
  %640 = vmatprep.subr.mxu0 0.0
  %641 = vmatpush1.msra.mxu0 0.0
  %642 = vmatprep.subr.mxu0 0.0
  %643 = vmatpush1.msra.mxu0 0.0
  %644 = vmatprep.subr.mxu0 0.0
  %645 = vmatpush1.msra.mxu0 0.0
  %646 = vmatprep.subr.mxu0 0.0
  %647 = vmatpush1.msra.mxu0 0.0
  %648 = vmatprep.subr.mxu0 0.0
  %649 = vmatpush1.msra.mxu0 0.0
  %650 = vmatprep.subr.mxu0 0.0
  %651 = vmatpush1.msra.mxu0 0.0
  %652 = vmatprep.subr.mxu0 0.0
  %653 = vmatpush1.msra.mxu0 0.0
  %654 = vmatprep.subr.mxu0 0.0
  %655 = vmatpush1.msra.mxu0 0.0
  %656 = vmatprep.subr.mxu0 0.0
  %657 = vmatpush1.msra.mxu0 0.0
  %658 = vmatprep.subr.mxu0 0.0
  %659 = vmatpush1.msra.mxu0 0.0
  %660 = vmatprep.subr.mxu0 0.0
  %661 = vmatpush1.msra.mxu0 0.0
  %662 = vmatprep.subr.mxu0 0.0
  %663 = vmatpush1.msra.mxu0 0.0
  %664 = vmatprep.subr.mxu0 0.0
  %665 = vmatpush1.msra.mxu0 0.0
  %666 = vmatprep.subr.mxu0 0.0
  %667 = vmatpush1.msra.mxu0 0.0
  %668 = vmatprep.subr.mxu0 0.0
  %669 = vmatpush1.msra.mxu0 0.0
  %670 = vmatprep.subr.mxu0 0.0
  %671 = vmatpush1.msra.mxu0 0.0
  %672 = vmatprep.subr.mxu0 0.0
  %673 = vmatpush1.msra.mxu0 0.0
  %674 = vmatprep.subr.mxu0 0.0
  %675 = vmatpush1.msra.mxu0 0.0
  %676 = vmatprep.subr.mxu0 0.0
  %677 = vmatpush1.msra.mxu0 0.0
  %678 = vmatprep.subr.mxu0 0.0
  %679 = vmatpush1.msra.mxu0 0.0
  %680 = vmatprep.subr.mxu0 0.0
  %681 = vmatpush1.msra.mxu0 0.0
  %682 = vmatprep.subr.mxu0 0.0
  %683 = vmatpush1.msra.mxu0 0.0
  %684 = vmatprep.subr.mxu0 0.0
  %685 = vmatpush1.msra.mxu0 0.0
  %686 = vmatprep.subr.mxu0 0.0
  %687 = vmatpush1.msra.mxu0 0.0
  %688 = vmatprep.subr.mxu0 0.0
  %689 = vmatpush1.msra.mxu0 0.0
  %690 = vmatprep.subr.mxu0 0.0
  %691 = vmatpush1.msra.mxu0 0.0
  %692 = vmatprep.subr.mxu0 0.0
  %693 = vmatpush1.msra.mxu0 0.0
  %694 = vmatprep.subr.mxu0 0.0
  %695 = vmatpush1.msra.mxu0 0.0
  %696 = vmatprep.mubr.f32.mxu0 0.0
  %697 = vmatmul.mubr.f32.gmra.mrb[0].mxu0 %v624
  %v698 = vpop.f32.mrb[0].mxu0
  %v699 = vadd.f32 0.0, %v698
  %v700 = vpop.f32.mrb[0].mxu0
  %701 = vmatprep.mubr.f32.mxu0 0.0
  %702 = vmatmul.mubr.f32.gmra.mrb[0].mxu0 %v627
  %v703 = vpop.f32.mrb[0].mxu0
  %v704 = vadd.f32 0.0, %v703
  %v705 = vpop.f32.mrb[0].mxu0
  %706 = vmatprep.mubr.f32.mxu0 0.0
  %707 = vmatmul.mubr.f32.gmra.mrb[0].mxu0 %v630
  %v708 = vpop.f32.mrb[0].mxu0
  %v709 = vadd.f32 0.0, %v708
  %v710 = vpop.f32.mrb[0].mxu0
  %711 = vdwg.mxu0
  %v712 = vld [vmem:[%s7] sm:$0xff]
  %v713 = vld [vmem:[%s7 + $0x8] sm:$0xff]
  %v714 = vld [vmem:[%s7 + $0x10] sm:$0xff]
  %v716 = vsel %vm74, %v712, 0
  %v719 = vsel %vm74, %v713, 0
  %v722 = vsel %vm74, %v714, 0
  %724 = vmatprep.subr.mxu0 0.0
  %725 = vmatpush1.msra.mxu0 %v69
  %726 = vmatprep.subr.mxu0 0.0
  %727 = vmatpush1.msra.mxu0 %v70
  %728 = vmatprep.subr.mxu0 0.0
  %729 = vmatpush1.msra.mxu0 %v71
  %730 = vmatprep.subr.mxu0 0.0
  %731 = vmatpush1.msra.mxu0 0.0
  %732 = vmatprep.subr.mxu0 0.0
  %733 = vmatpush1.msra.mxu0 0.0
  %734 = vmatprep.subr.mxu0 0.0
  %735 = vmatpush1.msra.mxu0 0.0
  %736 = vmatprep.subr.mxu0 0.0
  %737 = vmatpush1.msra.mxu0 0.0
  %738 = vmatprep.subr.mxu0 0.0
  %739 = vmatpush1.msra.mxu0 0.0
  %740 = vmatprep.subr.mxu0 0.0
  %741 = vmatpush1.msra.mxu0 0.0
  %742 = vmatprep.subr.mxu0 0.0
  %743 = vmatpush1.msra.mxu0 0.0
  %744 = vmatprep.subr.mxu0 0.0
  %745 = vmatpush1.msra.mxu0 0.0
  %746 = vmatprep.subr.mxu0 0.0
  %747 = vmatpush1.msra.mxu0 0.0
  %748 = vmatprep.subr.mxu0 0.0
  %749 = vmatpush1.msra.mxu0 0.0
  %750 = vmatprep.subr.mxu0 0.0
  %751 = vmatpush1.msra.mxu0 0.0
  %752 = vmatprep.subr.mxu0 0.0
  %753 = vmatpush1.msra.mxu0 0.0
  %754 = vmatprep.subr.mxu0 0.0
  %755 = vmatpush1.msra.mxu0 0.0
  %756 = vmatprep.subr.mxu0 0.0
  %757 = vmatpush1.msra.mxu0 0.0
  %758 = vmatprep.subr.mxu0 0.0
  %759 = vmatpush1.msra.mxu0 0.0
  %760 = vmatprep.subr.mxu0 0.0
  %761 = vmatpush1.msra.mxu0 0.0
  %762 = vmatprep.subr.mxu0 0.0
  %763 = vmatpush1.msra.mxu0 0.0
  %764 = vmatprep.subr.mxu0 0.0
  %765 = vmatpush1.msra.mxu0 0.0
  %766 = vmatprep.subr.mxu0 0.0
  %767 = vmatpush1.msra.mxu0 0.0
  %768 = vmatprep.subr.mxu0 0.0
  %769 = vmatpush1.msra.mxu0 0.0
  %770 = vmatprep.subr.mxu0 0.0
  %771 = vmatpush1.msra.mxu0 0.0
  %772 = vmatprep.subr.mxu0 0.0
  %773 = vmatpush1.msra.mxu0 0.0
  %774 = vmatprep.subr.mxu0 0.0
  %775 = vmatpush1.msra.mxu0 0.0
  %776 = vmatprep.subr.mxu0 0.0
  %777 = vmatpush1.msra.mxu0 0.0
  %778 = vmatprep.subr.mxu0 0.0
  %779 = vmatpush1.msra.mxu0 0.0
  %780 = vmatprep.subr.mxu0 0.0
  %781 = vmatpush1.msra.mxu0 0.0
  %782 = vmatprep.subr.mxu0 0.0
  %783 = vmatpush1.msra.mxu0 0.0
  %784 = vmatprep.subr.mxu0 0.0
  %785 = vmatpush1.msra.mxu0 0.0
  %786 = vmatprep.subr.mxu0 0.0
  %787 = vmatpush1.msra.mxu0 0.0
  %788 = vmatprep.mubr.f32.mxu0 0.0
  %789 = vmatmul.mubr.f32.gmra.mrb[0].mxu0 %v716
  %v790 = vpop.f32.mrb[0].mxu0
  %v791 = vadd.f32 0.0, %v790
  %v792 = vpop.f32.mrb[0].mxu0
  %793 = vmatprep.mubr.f32.mxu0 0.0
  %794 = vmatmul.mubr.f32.gmra.mrb[0].mxu0 %v719
  %v795 = vpop.f32.mrb[0].mxu0
  %v796 = vadd.f32 0.0, %v795
  %v797 = vpop.f32.mrb[0].mxu0
  %798 = vmatprep.mubr.f32.mxu0 0.0
  %799 = vmatmul.mubr.f32.gmra.mrb[0].mxu0 %v722
  %v800 = vpop.f32.mrb[0].mxu0
  %v801 = vadd.f32 0.0, %v800
  %v802 = vpop.f32.mrb[0].mxu0
  %803 = vdwg.mxu0
  %v804 = vld [vmem:[%s10] sm:$0xff]
  %v805 = vld [vmem:[%s10 + $0x8] sm:$0xff]
  %v806 = vld [vmem:[%s10 + $0x10] sm:$0xff]
  %v808 = vsel %vm241, %v804, 0
  %v811 = vsel %vm241, %v805, 0
  %v814 = vsel %vm241, %v806, 0
  %816 = vmatprep.subr.mxu0 0.0
  %817 = vmatpush1.msra.mxu0 %v616
  %818 = vmatprep.subr.mxu0 0.0
  %819 = vmatpush1.msra.mxu0 %v617
  %820 = vmatprep.subr.mxu0 0.0
  %821 = vmatpush1.msra.mxu0 0.0
  %822 = vmatprep.subr.mxu0 0.0
  %823 = vmatpush1.msra.mxu0 0.0
  %824 = vmatprep.subr.mxu0 0.0
  %825 = vmatpush1.msra.mxu0 0.0
  %826 = vmatprep.subr.mxu0 0.0
  %827 = vmatpush1.msra.mxu0 0.0
  %828 = vmatprep.subr.mxu0 0.0
  %829 = vmatpush1.msra.mxu0 0.0
  %830 = vmatprep.subr.mxu0 0.0
  %831 = vmatpush1.msra.mxu0 0.0
  %832 = vmatprep.subr.mxu0 0.0
  %833 = vmatpush1.msra.mxu0 0.0
  %834 = vmatprep.subr.mxu0 0.0
  %835 = vmatpush1.msra.mxu0 0.0
  %836 = vmatprep.subr.mxu0 0.0
  %837 = vmatpush1.msra.mxu0 0.0
  %838 = vmatprep.subr.mxu0 0.0
  %839 = vmatpush1.msra.mxu0 0.0
  %840 = vmatprep.subr.mxu0 0.0
  %841 = vmatpush1.msra.mxu0 0.0
  %842 = vmatprep.subr.mxu0 0.0
  %843 = vmatpush1.msra.mxu0 0.0
  %844 = vmatprep.subr.mxu0 0.0
  %845 = vmatpush1.msra.mxu0 0.0
  %846 = vmatprep.subr.mxu0 0.0
  %847 = vmatpush1.msra.mxu0 0.0
  %848 = vmatprep.subr.mxu0 0.0
  %849 = vmatpush1.msra.mxu0 0.0
  %850 = vmatprep.subr.mxu0 0.0
  %851 = vmatpush1.msra.mxu0 0.0
  %852 = vmatprep.subr.mxu0 0.0
  %853 = vmatpush1.msra.mxu0 0.0
  %854 = vmatprep.subr.mxu0 0.0
  %855 = vmatpush1.msra.mxu0 0.0
  %856 = vmatprep.subr.mxu0 0.0
  %857 = vmatpush1.msra.mxu0 0.0
  %858 = vmatprep.subr.mxu0 0.0
  %859 = vmatpush1.msra.mxu0 0.0
  %860 = vmatprep.subr.mxu0 0.0
  %861 = vmatpush1.msra.mxu0 0.0
  %862 = vmatprep.subr.mxu0 0.0
  %863 = vmatpush1.msra.mxu0 0.0
  %864 = vmatprep.subr.mxu0 0.0
  %865 = vmatpush1.msra.mxu0 0.0
  %866 = vmatprep.subr.mxu0 0.0
  %867 = vmatpush1.msra.mxu0 0.0
  %868 = vmatprep.subr.mxu0 0.0
  %869 = vmatpush1.msra.mxu0 0.0
  %870 = vmatprep.subr.mxu0 0.0
  %871 = vmatpush1.msra.mxu0 0.0
  %872 = vmatprep.subr.mxu0 0.0
  %873 = vmatpush1.msra.mxu0 0.0
  %874 = vmatprep.subr.mxu0 0.0
  %875 = vmatpush1.msra.mxu0 0.0
  %876 = vmatprep.subr.mxu0 0.0
  %877 = vmatpush1.msra.mxu0 0.0
  %878 = vmatprep.subr.mxu0 0.0
  %879 = vmatpush1.msra.mxu0 0.0
  %880 = vmatprep.mubr.f32.mxu0 0.0
  %881 = vmatmul.mubr.f32.gmra.mrb[0].mxu0 %v808
  %v882 = vpop.f32.mrb[0].mxu0
  %v883 = vadd.f32 0.0, %v882
  %v884 = vpop.f32.mrb[0].mxu0
  %885 = vmatprep.mubr.f32.mxu0 0.0
  %886 = vmatmul.mubr.f32.gmra.mrb[0].mxu0 %v811
  %v887 = vpop.f32.mrb[0].mxu0
  %v888 = vadd.f32 0.0, %v887
  %v889 = vpop.f32.mrb[0].mxu0
  %890 = vmatprep.mubr.f32.mxu0 0.0
  %891 = vmatmul.mubr.f32.gmra.mrb[0].mxu0 %v814
  %v892 = vpop.f32.mrb[0].mxu0
  %v893 = vadd.f32 0.0, %v892
  %v894 = vpop.f32.mrb[0].mxu0
  %895 = vdwg.mxu0
  %v896 = vld [vmem:[%s11] sm:$0xff]
  %v897 = vld [vmem:[%s11 + $0x8] sm:$0xff]
  %v898 = vld [vmem:[%s11 + $0x10] sm:$0xff]
  %v900 = vsel %vm241, %v896, 0
  %v903 = vsel %vm241, %v897, 0
  %v906 = vsel %vm241, %v898, 0
  %908 = vmatprep.subr.mxu0 0.0
  %909 = vmatpush1.msra.mxu0 %v616
  %910 = vmatprep.subr.mxu0 0.0
  %911 = vmatpush1.msra.mxu0 %v617
  %912 = vmatprep.subr.mxu0 0.0
  %913 = vmatpush1.msra.mxu0 0.0
  %914 = vmatprep.subr.mxu0 0.0
  %915 = vmatpush1.msra.mxu0 0.0
  %916 = vmatprep.subr.mxu0 0.0
  %917 = vmatpush1.msra.mxu0 0.0
  %918 = vmatprep.subr.mxu0 0.0
  %919 = vmatpush1.msra.mxu0 0.0
  %920 = vmatprep.subr.mxu0 0.0
  %921 = vmatpush1.msra.mxu0 0.0
  %922 = vmatprep.subr.mxu0 0.0
  %923 = vmatpush1.msra.mxu0 0.0
  %924 = vmatprep.subr.mxu0 0.0
  %925 = vmatpush1.msra.mxu0 0.0
  %926 = vmatprep.subr.mxu0 0.0
  %927 = vmatpush1.msra.mxu0 0.0
  %928 = vmatprep.subr.mxu0 0.0
  %929 = vmatpush1.msra.mxu0 0.0
  %930 = vmatprep.subr.mxu0 0.0
  %931 = vmatpush1.msra.mxu0 0.0
  %932 = vmatprep.subr.mxu0 0.0
  %933 = vmatpush1.msra.mxu0 0.0
  %934 = vmatprep.subr.mxu0 0.0
  %935 = vmatpush1.msra.mxu0 0.0
  %936 = vmatprep.subr.mxu0 0.0
  %937 = vmatpush1.msra.mxu0 0.0
  %938 = vmatprep.subr.mxu0 0.0
  %939 = vmatpush1.msra.mxu0 0.0
  %940 = vmatprep.subr.mxu0 0.0
  %941 = vmatpush1.msra.mxu0 0.0
  %942 = vmatprep.subr.mxu0 0.0
  %943 = vmatpush1.msra.mxu0 0.0
  %944 = vmatprep.subr.mxu0 0.0
  %945 = vmatpush1.msra.mxu0 0.0
  %946 = vmatprep.subr.mxu0 0.0
  %947 = vmatpush1.msra.mxu0 0.0
  %948 = vmatprep.subr.mxu0 0.0
  %949 = vmatpush1.msra.mxu0 0.0
  %950 = vmatprep.subr.mxu0 0.0
  %951 = vmatpush1.msra.mxu0 0.0
  %952 = vmatprep.subr.mxu0 0.0
  %953 = vmatpush1.msra.mxu0 0.0
  %954 = vmatprep.subr.mxu0 0.0
  %955 = vmatpush1.msra.mxu0 0.0
  %956 = vmatprep.subr.mxu0 0.0
  %957 = vmatpush1.msra.mxu0 0.0
  %958 = vmatprep.subr.mxu0 0.0
  %959 = vmatpush1.msra.mxu0 0.0
  %960 = vmatprep.subr.mxu0 0.0
  %961 = vmatpush1.msra.mxu0 0.0
  %962 = vmatprep.subr.mxu0 0.0
  %963 = vmatpush1.msra.mxu0 0.0
  %964 = vmatprep.subr.mxu0 0.0
  %965 = vmatpush1.msra.mxu0 0.0
  %966 = vmatprep.subr.mxu0 0.0
  %967 = vmatpush1.msra.mxu0 0.0
  %968 = vmatprep.subr.mxu0 0.0
  %969 = vmatpush1.msra.mxu0 0.0
  %970 = vmatprep.subr.mxu0 0.0
  %971 = vmatpush1.msra.mxu0 0.0
  %972 = vmatprep.mubr.f32.mxu0 0.0
  %973 = vmatmul.mubr.f32.gmra.mrb[0].mxu0 %v900
  %v974 = vpop.f32.mrb[0].mxu0
  %v975 = vadd.f32 0.0, %v974
  %v976 = vpop.f32.mrb[0].mxu0
  %977 = vmatprep.mubr.f32.mxu0 0.0
  %978 = vmatmul.mubr.f32.gmra.mrb[0].mxu0 %v903
  %v979 = vpop.f32.mrb[0].mxu0
  %v980 = vadd.f32 0.0, %v979
  %v981 = vpop.f32.mrb[0].mxu0
  %982 = vmatprep.mubr.f32.mxu0 0.0
  %983 = vmatmul.mubr.f32.gmra.mrb[0].mxu0 %v906
  %v984 = vpop.f32.mrb[0].mxu0
  %v985 = vadd.f32 0.0, %v984
  %v986 = vpop.f32.mrb[0].mxu0
  %987 = vdwg.mxu0
  %v988 = vld [vmem:[%s3] sm:$0xff]
  %v989 = vld [vmem:[%s3 + $0x8] sm:$0xff]
  %v990 = vld [vmem:[%s3 + $0x10] sm:$0xff]
  %v991 = vmul.f32 %v988, %v69
  %v992 = vmul.f32 %v989, %v70
  %v993 = vmul.f32 %v990, %v71
  %994 = vst.msk [vmem:[#allocation3] sm:$0xff] %vm410, %v69
  %995 = vst.msk [vmem:[#allocation3 + $0x8] sm:$0xff] %vm410, %v70
  %996 = vst.msk [vmem:[#allocation3 + $0x10] sm:$0xff] %vm410, %v71
  %1000 = vrot.lane.b32.xlu0 %v991, 1
  %v1001 = vpop.permute.xlu0 %1000
  %1002 = vrot.lane.b32.xlu0 %v992, 1
  %v1003 = vpop.permute.xlu0 %1002
  %1004 = vrot.lane.b32.xlu0 %v993, 1
  %v1005 = vpop.permute.xlu0 %1004
  %1009 = vst.msk [vmem:[#allocation3] sm:$0xff] %vm421, %v1001
  %1010 = vst.msk [vmem:[#allocation3 + $0x8] sm:$0xff] %vm421, %v1003
  %1011 = vst.msk [vmem:[#allocation3 + $0x10] sm:$0xff] %vm421, %v1005
  %1015 = vrot.lane.b32.xlu0 %v699, 2
  %v1016 = vpop.permute.xlu0 %1015
  %1017 = vrot.lane.b32.xlu0 %v704, 2
  %v1018 = vpop.permute.xlu0 %1017
  %1019 = vrot.lane.b32.xlu0 %v709, 2
  %v1020 = vpop.permute.xlu0 %1019
  %1024 = vst.msk [vmem:[#allocation3] sm:$0xff] %vm432, %v1016
  %1025 = vst.msk [vmem:[#allocation3 + $0x8] sm:$0xff] %vm432, %v1018
  %1026 = vst.msk [vmem:[#allocation3 + $0x10] sm:$0xff] %vm432, %v1020
  %1030 = vrot.lane.b32.xlu0 %v791, 3
  %v1031 = vpop.permute.xlu0 %1030
  %1032 = vrot.lane.b32.xlu0 %v796, 3
  %v1033 = vpop.permute.xlu0 %1032
  %1034 = vrot.lane.b32.xlu0 %v801, 3
  %v1035 = vpop.permute.xlu0 %1034
  %1039 = vst.msk [vmem:[#allocation3] sm:$0xff] %vm443, %v1031
  %1040 = vst.msk [vmem:[#allocation3 + $0x8] sm:$0xff] %vm443, %v1033
  %1041 = vst.msk [vmem:[#allocation3 + $0x10] sm:$0xff] %vm443, %v1035
  %1045 = vrot.lane.b32.xlu0 %v883, 4
  %v1046 = vpop.permute.xlu0 %1045
  %1047 = vrot.lane.b32.xlu0 %v888, 4
  %v1048 = vpop.permute.xlu0 %1047
  %1049 = vrot.lane.b32.xlu0 %v893, 4
  %v1050 = vpop.permute.xlu0 %1049
  %vm1054 = vcmask 162848
  %1055 = vst.msk [vmem:[#allocation3] sm:$0xff] %vm1054, %v1046
  %1056 = vst.msk [vmem:[#allocation3 + $0x8] sm:$0xff] %vm1054, %v1048
  %1057 = vst.msk [vmem:[#allocation3 + $0x10] sm:$0xff] %vm1054, %v1050
  %1061 = vrot.lane.b32.xlu0 %v975, 20
  %v1062 = vpop.permute.xlu0 %1061
  %1063 = vrot.lane.b32.xlu0 %v980, 20
  %v1064 = vpop.permute.xlu0 %1063
  %1065 = vrot.lane.b32.xlu0 %v985, 20
  %v1066 = vpop.permute.xlu0 %1065
  %vm1070 = vcmask 294048
  %1071 = vst.msk [vmem:[#allocation3] sm:$0xff] %vm1070, %v1062
  %1072 = vst.msk [vmem:[#allocation3 + $0x8] sm:$0xff] %vm1070, %v1064
  %1073 = vst.msk [vmem:[#allocation3 + $0x10] sm:$0xff] %vm1070, %v1066
  %v1074 = vld [vmem:[#allocation3] sm:$0xff]
  %v1075 = vld [vmem:[#allocation3 + $0x8] sm:$0xff]
  %v1076 = vld [vmem:[#allocation3 + $0x10] sm:$0xff]
  %v1077 = vld [vmem:[%s14] sm:$0xff]
  %v1078 = vld [vmem:[%s14 + $0x8] sm:$0xff]
  %v1079 = vld [vmem:[%s14 + $0x10] sm:$0xff]
  %v1080 = vld [vmem:[%s14 + $0x18] sm:$0xff]
  %v1081 = vld [vmem:[%s14 + $0x20] sm:$0xf]
  %v1082 = vld [vmem:[%s15] sm:$0x1]
  %v1084 = vlaneseq
  %v1085 = vshrl.u32 %v1084, 7
  %v1086 = vsub.s32 0, %v1085
  %v1087 = vrot.slane %v1082, %v1086
  %vm1089 = vcmask 293888
  %v1091 = vsel %vm1089, %v1074, 0
  %v1094 = vsel %vm1089, %v1075, 0
  %v1097 = vsel %vm1089, %v1076, 0
  %vm1099 = vcmask 1043456
  %v1101 = vsel %vm1099, %v1081, 0
  %1103 = vmatprep.subr.mxu0 0.0
  %1104 = vmatpush1.msra.mxu0 %v1077
  %1105 = vmatprep.subr.mxu0 0.0
  %1106 = vmatpush1.msra.mxu0 %v1078
  %1107 = vmatprep.subr.mxu0 0.0
  %1108 = vmatpush1.msra.mxu0 %v1079
  %1109 = vmatprep.subr.mxu0 0.0
  %1110 = vmatpush1.msra.mxu0 %v1080
  %1111 = vmatprep.subr.mxu0 0.0
  %1112 = vmatpush1.msra.mxu0 %v1101
  %1113 = vmatprep.subr.mxu0 0.0
  %1114 = vmatpush1.msra.mxu0 0.0
  %1115 = vmatprep.subr.mxu0 0.0
  %1116 = vmatpush1.msra.mxu0 0.0
  %1117 = vmatprep.subr.mxu0 0.0
  %1118 = vmatpush1.msra.mxu0 0.0
  %1119 = vmatprep.subr.mxu0 0.0
  %1120 = vmatpush1.msra.mxu0 0.0
  %1121 = vmatprep.subr.mxu0 0.0
  %1122 = vmatpush1.msra.mxu0 0.0
  %1123 = vmatprep.subr.mxu0 0.0
  %1124 = vmatpush1.msra.mxu0 0.0
  %1125 = vmatprep.subr.mxu0 0.0
  %1126 = vmatpush1.msra.mxu0 0.0
  %1127 = vmatprep.subr.mxu0 0.0
  %1128 = vmatpush1.msra.mxu0 0.0
  %1129 = vmatprep.subr.mxu0 0.0
  %1130 = vmatpush1.msra.mxu0 0.0
  %1131 = vmatprep.subr.mxu0 0.0
  %1132 = vmatpush1.msra.mxu0 0.0
  %1133 = vmatprep.subr.mxu0 0.0
  %1134 = vmatpush1.msra.mxu0 0.0
  %1135 = vmatprep.subr.mxu0 0.0
  %1136 = vmatpush1.msra.mxu0 0.0
  %1137 = vmatprep.subr.mxu0 0.0
  %1138 = vmatpush1.msra.mxu0 0.0
  %1139 = vmatprep.subr.mxu0 0.0
  %1140 = vmatpush1.msra.mxu0 0.0
  %1141 = vmatprep.subr.mxu0 0.0
  %1142 = vmatpush1.msra.mxu0 0.0
  %1143 = vmatprep.subr.mxu0 0.0
  %1144 = vmatpush1.msra.mxu0 0.0
  %1145 = vmatprep.subr.mxu0 0.0
  %1146 = vmatpush1.msra.mxu0 0.0
  %1147 = vmatprep.subr.mxu0 0.0
  %1148 = vmatpush1.msra.mxu0 0.0
  %1149 = vmatprep.subr.mxu0 0.0
  %1150 = vmatpush1.msra.mxu0 0.0
  %1151 = vmatprep.subr.mxu0 0.0
  %1152 = vmatpush1.msra.mxu0 0.0
  %1153 = vmatprep.subr.mxu0 0.0
  %1154 = vmatpush1.msra.mxu0 0.0
  %1155 = vmatprep.subr.mxu0 0.0
  %1156 = vmatpush1.msra.mxu0 0.0
  %1157 = vmatprep.subr.mxu0 0.0
  %1158 = vmatpush1.msra.mxu0 0.0
  %1159 = vmatprep.subr.mxu0 0.0
  %1160 = vmatpush1.msra.mxu0 0.0
  %1161 = vmatprep.subr.mxu0 0.0
  %1162 = vmatpush1.msra.mxu0 0.0
  %1163 = vmatprep.subr.mxu0 0.0
  %1164 = vmatpush1.msra.mxu0 0.0
  %1165 = vmatprep.subr.mxu0 0.0
  %1166 = vmatpush1.msra.mxu0 0.0
  %1167 = vmatprep.mubr.f32.mxu0 0.0
  %1168 = vmatmul.mubr.f32.gmra.mrb[0].mxu0 %v1091
  %v1169 = vpop.f32.mrb[0].mxu0
  %v1170 = vadd.f32 %v1087, %v1169
  %v1171 = vpop.f32.mrb[0].mxu0
  %1172 = vmatprep.mubr.f32.mxu0 0.0
  %1173 = vmatmul.mubr.f32.gmra.mrb[0].mxu0 %v1094
  %v1174 = vpop.f32.mrb[0].mxu0
  %v1175 = vadd.f32 %v1087, %v1174
  %v1176 = vpop.f32.mrb[0].mxu0
  %1177 = vmatprep.mubr.f32.mxu0 0.0
  %1178 = vmatmul.mubr.f32.gmra.mrb[0].mxu0 %v1097
  %v1179 = vpop.f32.mrb[0].mxu0
  %v1180 = vadd.f32 %v1087, %v1179
  %v1181 = vpop.f32.mrb[0].mxu0
  %1182 = vdwg.mxu0
  %v1183 = vld [vmem:[%s18] sm:$0x1]
  %v1184 = vld [vmem:[%s19] sm:$0x1]
  %v1185 = vmax.f32 %v1170, 0.0
  %v1186 = vmax.f32 %v1175, 0.0
  %v1187 = vmax.f32 %v1180, 0.0
  %v1188 = vsel %vm568, %v1185, %v1170
  %v1189 = vsel %vm568, %v1186, %v1175
  %v1190 = vsel %vm568, %v1187, %v1180
  %v1191 = vsel %vm241, %v1188, 0.0
  %v1192 = vsel %vm241, %v1189, 0.0
  %v1193 = vadd.f32 %v1191, %v1192
  %v1194 = vsel %vm241, %v1190, 0.0
  %v1195 = vadd.f32 %v1193, %v1194
  %v1196 = vrot.slane %v1195, 4
  %v1197 = vadd.f32 %v1195, %v1196
  %v1198 = vrot.slane %v1197, 2
  %v1199 = vadd.f32 %v1197, %v1198
  %v1200 = vrot.slane %v1199, 1
  %v1201 = vadd.f32 %v1199, %v1200
  %v1202 = vrcp.pop 24.0
  %v1203 = vmul.f32 %v1201, %v1202
  %v1204 = vsub.f32 %v1188, %v1203
  %v1205 = vsub.f32 %v1189, %v1203
  %v1206 = vsub.f32 %v1190, %v1203
  %v1207 = vmul.f32 %v1204, %v1204
  %v1208 = vmul.f32 %v1205, %v1205
  %v1209 = vmul.f32 %v1206, %v1206
  %v1210 = vsel %vm241, %v1207, 0.0
  %v1211 = vsel %vm241, %v1208, 0.0
  %v1212 = vadd.f32 %v1210, %v1211
  %v1213 = vsel %vm241, %v1209, 0.0
  %v1214 = vadd.f32 %v1212, %v1213
  %v1215 = vrot.slane %v1214, 4
  %v1216 = vadd.f32 %v1214, %v1215
  %v1217 = vrot.slane %v1216, 2
  %v1218 = vadd.f32 %v1216, %v1217
  %v1219 = vrot.slane %v1218, 1
  %v1220 = vadd.f32 %v1218, %v1219
  %v1221 = vmul.f32 %v1220, %v1202
  %v1222 = vadd.f32 %v1221, 1e-05
  %v1223 = vrsqrt.pop %v1222
  %v1224 = vmul.f32 %v1204, %v1223
  %v1225 = vmul.f32 %v1205, %v1223
  %v1226 = vmul.f32 %v1206, %v1223
  %v1228 = vlaneseq
  %v1229 = vshrl.u32 %v1228, 7
  %v1230 = vsub.s32 0, %v1229
  %v1231 = vrot.slane %v1183, %v1230
  %v1233 = vmul.f32 %v1224, %v1231
  %v1234 = vmul.f32 %v1225, %v1231
  %v1235 = vmul.f32 %v1226, %v1231
  %v1237 = vlaneseq
  %v1238 = vshrl.u32 %v1237, 7
  %v1239 = vsub.s32 0, %v1238
  %v1240 = vrot.slane %v1184, %v1239
  %v1242 = vadd.f32 %v1233, %v1240
  %v1243 = vadd.f32 %v1234, %v1240
  %v1244 = vadd.f32 %v1235, %v1240
  %1245 = vst.msk [vmem:[%s21] sm:$0xff] %vm241, %v1242
  %1246 = vst.msk [vmem:[%s21 + $0x8] sm:$0xff] %vm241, %v1243
  %1247 = vst.msk [vmem:[%s21 + $0x10] sm:$0xff] %vm241, %v1244
  // Predicated region
  $region82: #{gnn_forward.2} parent=0 // pred_check
    _
  $region83: #{gnn_forward.2} parent=0 // pred_check_branch
    %1249 = sbr.rel (0) target = $region85
  $region84: #{gnn_forward.2} parent=0 // pred_region
    _
  $region85: #{gnn_forward.2} parent=0 // pred_fallthru
    _
  // Predicated region
  $region86: #{gnn_forward.2} parent=0 // pred_check
    _
  $region87: #{gnn_forward.2} parent=0 // pred_check_branch
    %1251 = sbr.rel (0) target = $region89
  $region88: #{gnn_forward.2} parent=0 // pred_region
    _
  $region89: #{gnn_forward.2} parent=0 // pred_fallthru
    _
  // Predicated region
  $region90: #{gnn_forward.2} parent=0 // pred_check
    _
  $region91: #{gnn_forward.2} parent=0 // pred_check_branch
    %1253 = sbr.rel (0) target = $region93
  $region92: #{gnn_forward.2} parent=0 // pred_region
    _
  $region93: #{gnn_forward.2} parent=0 // pred_fallthru
    _
  // Predicated region
  $region94: #{gnn_forward.2} parent=0 // pred_check
    _
  $region95: #{gnn_forward.2} parent=0 // pred_check_branch
    %1255 = sbr.rel (0) target = $region97
  $region96: #{gnn_forward.2} parent=0 // pred_region
    _
  $region97: #{gnn_forward.2} parent=0 // pred_fallthru
    _

</llo_original>
